<compile_context>
chip_gen: v6e
topology: v6e:2x2x1
jax: 0.10.0
libtpu: 0.0.40
codegen_flags: <defaults>
</compile_context>

<pallas_src>
import functools
import math

import jax
import jax.numpy as jnp
from jax.experimental import pallas as pl
from jax.experimental.pallas import tpu as pltpu

BN_EPS = 1e-5


def _round_up(x, m):
    return (x + m - 1) // m * m


# ---------------------------------------------------------------------------
# Fused Pallas matmul kernel: out = [relu](A @ W + bias [+ residual])
# ---------------------------------------------------------------------------
def _mm_kernel(*refs, relu, has_res):
    if has_res:
        a_ref, w_ref, b_ref, r_ref, o_ref = refs
    else:
        a_ref, w_ref, b_ref, o_ref = refs
        r_ref = None
    out = jnp.dot(a_ref[...], w_ref[...], preferred_element_type=jnp.float32)
    out = out + b_ref[...]
    if r_ref is not None:
        out = out + r_ref[...].astype(jnp.float32)
    if relu:
        out = jnp.maximum(out, 0.0)
    o_ref[...] = out.astype(o_ref.dtype)


def _choose_tiles(M, K, Np, out_bytes, has_res):
    """Largest tiles that fit a ~24 MiB double-buffered VMEM budget."""
    tm = min(512, _round_up(M, 8))
    tn = next(t for t in (512, 256, 128) if Np % t == 0)

    def footprint(tm_, tn_):
        a = tm_ * K * 2                 # bf16 A tile
        w = K * tn_ * 2                 # bf16 W tile
        b = tn_ * 4                     # f32 bias tile
        r = tm_ * tn_ * 2 if has_res else 0
        o = tm_ * tn_ * out_bytes
        return 2 * (a + w + b + r + o)  # double-buffered pipeline stages

    budget = 24 * 1024 * 1024
    while footprint(tm, tn) > budget and (tn > 128 or tm > 8):
        if tn > 128:
            tn //= 2
        else:
            tm = max(8, _round_up(tm // 2, 8))
    return tm, tn, footprint(tm, tn)


def matmul_fused(a, w_p, bias_p, residual=None, relu=False,
                 out_dtype=jnp.bfloat16):
    """a:[M,K] bf16 (true, unpadded K); w_p:[K,Np] bf16 (BN scale folded,
    N padded to a multiple of 128, zero padded columns); bias_p:[1,Np] f32
    (zero in padded columns); residual:[M,Np] bf16 or None.
    Returns [M,Np] (padded columns stay exactly zero)."""
    M, K = a.shape
    Kw, Np = w_p.shape
    assert K == Kw and Np % 128 == 0
    has_res = residual is not None
    out_bytes = jnp.dtype(out_dtype).itemsize

    tm, tn, fp = _choose_tiles(M, K, Np, out_bytes, has_res)
    grid = (pl.cdiv(M, tm), Np // tn)

    in_specs = [
        pl.BlockSpec((tm, K), lambda i, j: (i, 0)),   # full-K A tile
        pl.BlockSpec((K, tn), lambda i, j: (0, j)),   # full-K W tile
        pl.BlockSpec((1, tn), lambda i, j: (0, j)),   # bias
    ]
    args = [a.astype(jnp.bfloat16), w_p, bias_p]
    if has_res:
        in_specs.append(pl.BlockSpec((tm, tn), lambda i, j: (i, j)))
        args.append(residual)

    kernel = functools.partial(_mm_kernel, relu=relu, has_res=has_res)
    vmem_limit = int(min(48 * 1024 * 1024, max(16 * 1024 * 1024, 2 * fp)))

    return pl.pallas_call(
        kernel,
        out_shape=jax.ShapeDtypeStruct((M, Np), out_dtype),
        grid_spec=pltpu.PrefetchScalarGridSpec(
            num_scalar_prefetch=0,
            grid=grid,
            in_specs=in_specs,
            out_specs=pl.BlockSpec((tm, tn), lambda i, j: (i, j)),
        ),
        compiler_params=pltpu.CompilerParams(
            dimension_semantics=("parallel", "parallel"),
            vmem_limit_bytes=vmem_limit),
    )(*args)


# ---------------------------------------------------------------------------
# Conv wrappers (channel-padded bf16 NHWC activations end-to-end).
# ---------------------------------------------------------------------------
def conv1x1_bn_act(x_nhwc, w_p, bias_p, stride=1, relu=False, residual=None,
                   out_dtype=jnp.bfloat16):
    if stride > 1:
        # TODO(synk): fold the stride-2 row selection into the matmul BlockSpec
        # (scalar-prefetch row offsets) instead of this strided-gather copy.
        x_nhwc = x_nhwc[:, ::stride, ::stride, :]
    N, H, W, C = x_nhwc.shape
    a = x_nhwc.reshape(N * H * W, C)
    out = matmul_fused(a, w_p, bias_p, residual=residual, relu=relu,
                       out_dtype=out_dtype)
    return out.reshape(N, H, W, -1)


def conv3x3_bn_act(x_nhwc, w_p, bias_p, cin, stride, relu=True,
                   out_dtype=jnp.bfloat16):
    """x_nhwc carries padded channels; slice back to the true `cin` as part of
    the im2col gather so the patch matrix is not 9x channel-inflated."""
    N, H, W, _ = x_nhwc.shape
    Ho = (H + 2 - 3) // stride + 1
    Wo = (W + 2 - 3) // stride + 1
    xp = jnp.pad(x_nhwc[..., :cin], ((0, 0), (1, 1), (1, 1), (0, 0)))
    # TODO(synk): move the 3x3 tap extraction into the kernel (tap reduction
    # axis over a pl.ANY NHWC input) to avoid materializing the 9x patch slab.
    patches = [xp[:, ki:ki + (Ho - 1) * stride + 1:stride,
                     kj:kj + (Wo - 1) * stride + 1:stride, :]
               for ki in range(3) for kj in range(3)]
    a = jnp.concatenate(patches, axis=-1).reshape(N * Ho * Wo, 9 * cin)
    out = matmul_fused(a, w_p, bias_p, relu=relu, out_dtype=out_dtype)
    return out.reshape(N, Ho, Wo, -1)


# ---------------------------------------------------------------------------
# Parameters: PyTorch-style raw params, one-time matmul-ready preparation.
# ---------------------------------------------------------------------------
def make_raw_params(key, inplanes, planes, with_down, expansion=4):
    ks = iter(jax.random.split(key, 32))

    def conv_w(cout, cin, k):
        n = k * k * cout  # matches m.weight.data.normal_(0, sqrt(2/n))
        return jax.random.normal(next(ks), (cout, cin, k, k),
                                 jnp.float32) * math.sqrt(2.0 / n)

    def bn(c):  # non-trivial eval-mode stats to exercise the BN fold
        return {
            "gamma": 0.8 + 0.4 * jax.random.uniform(next(ks), (c,), jnp.float32),
            "beta": 0.1 * jax.random.normal(next(ks), (c,), jnp.float32),
            "mean": 0.1 * jax.random.normal(next(ks), (c,), jnp.float32),
            "var": 0.8 + 0.4 * jax.random.uniform(next(ks), (c,), jnp.float32),
        }

    out_planes = planes * expansion
    raw = {
        "conv1_w": conv_w(planes, inplanes, 1), "bn1": bn(planes),
        "conv2_w": conv_w(planes, planes, 3), "bn2": bn(planes),
        "conv3_w": conv_w(out_planes, planes, 1), "bn3": bn(out_planes),
    }
    if with_down:
        raw["down_w"] = conv_w(out_planes, inplanes, 1)
        raw["down_bn"] = bn(out_planes)
    return raw


def _prep_conv(w_oihw, bn, cin_pad=None):
    """OIHW weight + BN -> bf16 [K, Np] matrix with BN scale folded into the
    columns and zeros in padded rows/columns, plus an f32 [1, Np] bias.
    K = kh*kw*cin (optionally with cin zero-padded to `cin_pad`); only the N
    axis is padded to a multiple of 128 (K stays the true reduction size)."""
    cout, cin, kh, kw = w_oihw.shape
    scale = bn["gamma"] / jnp.sqrt(bn["var"] + BN_EPS)
    bias = bn["beta"] - bn["mean"] * scale
    wm = jnp.transpose(w_oihw, (2, 3, 1, 0)) * scale[None, None, None, :]
    if cin_pad is not None and cin_pad > cin:
        wm = jnp.pad(wm, ((0, 0), (0, 0), (0, cin_pad - cin), (0, 0)))
        cin = cin_pad
    wm = wm.reshape(kh * kw * cin, cout)
    np_ = _round_up(cout, 128)
    w_p = jnp.pad(wm, ((0, 0), (0, np_ - cout))).astype(jnp.bfloat16)
    b_p = jnp.pad(bias, (0, np_ - cout)).reshape(1, np_).astype(jnp.float32)
    return w_p, b_p


def prepare_params(raw, stride, expansion=4):
    planes, inplanes = raw["conv1_w"].shape[0], raw["conv1_w"].shape[1]
    out_planes = planes * expansion
    cin_pad = _round_up(inplanes, 128)   # padded input-channel count
    mid_pad = _round_up(planes, 128)     # padded channel count after conv1/2

    p = {}
    p["conv1_w"], p["conv1_b"] = _prep_conv(raw["conv1_w"], raw["bn1"],
                                            cin_pad=cin_pad)
    p["conv2_w"], p["conv2_b"] = _prep_conv(raw["conv2_w"], raw["bn2"])  # K=9*planes
    p["conv3_w"], p["conv3_b"] = _prep_conv(raw["conv3_w"], raw["bn3"],
                                            cin_pad=mid_pad)
    has_down = "down_w" in raw
    if has_down:
        p["down_w"], p["down_b"] = _prep_conv(raw["down_w"], raw["down_bn"],
                                              cin_pad=cin_pad)
    else:
        # Identity residual: padded input channels must line up with conv3's
        # padded output channels.
        assert _round_up(out_planes, 128) == cin_pad
    cfg = {"stride": stride, "planes": planes, "out_planes": out_planes,
           "has_down": has_down, "cin_pad": cin_pad}
    return p, cfg


# ---------------------------------------------------------------------------
# Bottleneck forward (matches the PyTorch module; input/output NCHW).
# ---------------------------------------------------------------------------
def bottleneck_forward(params, x_nchw, cfg):
    N, Cin, H, W = x_nchw.shape
    cin_pad = cfg["cin_pad"]
    # TODO(synk): fold the NCHW<->NHWC layout change into the first/last
    # pallas_call (layout plumbing via BlockSpec) to avoid these XLA transposes.
    x = jnp.transpose(x_nchw, (0, 2, 3, 1)).astype(jnp.bfloat16)
    x = jnp.pad(x, ((0, 0), (0, 0), (0, 0), (0, cin_pad - Cin)))

    out = conv1x1_bn_act(x, params["conv1_w"], params["conv1_b"], relu=True)
    out = conv3x3_bn_act(out, params["conv2_w"], params["conv2_b"],
                         cfg["planes"], stride=cfg["stride"], relu=True)
    Nb, Ho, Wo, _ = out.shape

    if cfg["has_down"]:
        res = conv1x1_bn_act(x, params["down_w"], params["down_b"],
                             stride=cfg["stride"], relu=False)
        res2d = res.reshape(Nb * Ho * Wo, -1)
    else:
        res2d = x.reshape(N * H * W, cin_pad)

    # conv3 + bn3 + residual add + final ReLU fused into one kernel epilogue.
    out2d = out.reshape(Nb * Ho * Wo, -1)
    out3 = matmul_fused(out2d, params["conv3_w"], params["conv3_b"],
                        residual=res2d, relu=True, out_dtype=jnp.float32)
    out3 = out3.reshape(Nb, Ho, Wo, -1)[..., :cfg["out_planes"]]
    return jnp.transpose(out3, (0, 3, 1, 2))  # NHWC -> NCHW


# ---------------------------------------------------------------------------
# Pure-JAX f32 reference (eval-mode BN) for correctness checking.
# ---------------------------------------------------------------------------
def _conv_ref(x, w, stride, padding):
    return jax.lax.conv_general_dilated(
        x, w, window_strides=(stride, stride),
        padding=[(padding, padding), (padding, padding)],
        dimension_numbers=("NCHW", "OIHW", "NCHW"))


def _bn_ref(x, bn):
    scale = bn["gamma"] / jnp.sqrt(bn["var"] + BN_EPS)
    shift = bn["beta"] - bn["mean"] * scale
    return x * scale[None, :, None, None] + shift[None, :, None, None]


def bottleneck_ref(raw, x, stride):
    out = jax.nn.relu(_bn_ref(_conv_ref(x, raw["conv1_w"], 1, 0), raw["bn1"]))
    out = jax.nn.relu(_bn_ref(_conv_ref(out, raw["conv2_w"], stride, 1),
                              raw["bn2"]))
    out = _bn_ref(_conv_ref(out, raw["conv3_w"], 1, 0), raw["bn3"])
    if "down_w" in raw:
        residual = _bn_ref(_conv_ref(x, raw["down_w"], stride, 0),
                           raw["down_bn"])
    else:
        residual = x
    return jax.nn.relu(out + residual)


if __name__ == "__main__":
    key = jax.random.PRNGKey(0)
    kp1, kp2, kx1, kx2 = jax.random.split(key, 4)

    # Case 1: downsample path (1x1 stride-2 conv + BN on the residual).
    # inplanes=16, planes=8 -> out channels 32, 16x16 -> 8x8.
    raw1 = make_raw_params(kp1, inplanes=16, planes=8, with_down=True)
    prep1, cfg1 = prepare_params(raw1, stride=2)
    x1 = jax.random.normal(kx1, (2, 16, 16, 16), jnp.float32)  # NCHW
    fwd1 = jax.jit(functools.partial(bottleneck_forward, cfg=cfg1))
    out1 = jax.block_until_ready(fwd1(prep1, x1))
    assert out1.shape == (2, 32, 8, 8), out1.shape
    assert bool(jnp.all(jnp.isfinite(out1)))
    ref1 = bottleneck_ref(raw1, x1, stride=2)
    assert bool(jnp.allclose(out1, ref1, rtol=0.05, atol=0.15))

    # Case 2: identity residual path (inplanes == planes*4, stride=1).
    raw2 = make_raw_params(kp2, inplanes=32, planes=8, with_down=False)
    prep2, cfg2 = prepare_params(raw2, stride=1)
    x2 = jax.random.normal(kx2, (2, 32, 16, 16), jnp.float32)  # NCHW
    fwd2 = jax.jit(functools.partial(bottleneck_forward, cfg=cfg2))
    out2 = jax.block_until_ready(fwd2(prep2, x2))
    assert out2.shape == (2, 32, 16, 16), out2.shape
    assert bool(jnp.all(jnp.isfinite(out2)))
    ref2 = bottleneck_ref(raw2, x2, stride=1)
    assert bool(jnp.allclose(out2, ref2, rtol=0.05, atol=0.15))

    print("KERNEL_OK")
</pallas_src>

<mosaic_0001>
module attributes {stable_mosaic.version = 11 : i64} {
  func.func @_mm_kernel(%arg0: i32, %arg1: i32, %arg2: memref<512x128xbf16, #tpu.memory_space<vmem>>, %arg3: memref<128x128xbf16, #tpu.memory_space<vmem>>, %arg4: memref<1x128xf32, #tpu.memory_space<vmem>>, %arg5: memref<512x128xbf16, #tpu.memory_space<vmem>>) attributes {dimension_semantics = [#tpu.dimension_semantics<parallel>, #tpu.dimension_semantics<parallel>], iteration_bounds = array<i64: 1, 1>, scalar_prefetch = 0 : i64, scratch_operands = 0 : i64, tpu.core_type = #tpu.core_type<tc>, window_params = [{transform_indices = @transform_0, window_bounds = array<i64: 512, 128>}, {transform_indices = @transform_1, window_bounds = array<i64: 128, 128>}, {transform_indices = @transform_2, window_bounds = array<i64: 1, 128>}, {transform_indices = @transform_3, window_bounds = array<i64: 512, 128>}]} {
    %c0 = arith.constant 0 : index
    %c0_0 = arith.constant 0 : index
    %0 = vector.load %arg2[%c0, %c0_0] : memref<512x128xbf16, #tpu.memory_space<vmem>>, vector<512x128xbf16>
    %c0_1 = arith.constant 0 : index
    %c0_2 = arith.constant 0 : index
    %1 = vector.load %arg3[%c0_1, %c0_2] : memref<128x128xbf16, #tpu.memory_space<vmem>>, vector<128x128xbf16>
    %cst = arith.constant dense<0.000000e+00> : vector<512x128xf32>
    %2 = tpu.matmul %0, %1, %cst {dimension_numbers = #tpu.dot_dimension_numbers<[1], [0], [0], [1], [0, 0, 1, 1], [], []>} : vector<512x128xbf16>, vector<128x128xbf16>, vector<512x128xf32> -> vector<512x128xf32>
    %c0_3 = arith.constant 0 : index
    %c0_4 = arith.constant 0 : index
    %3 = vector.load %arg4[%c0_3, %c0_4] : memref<1x128xf32, #tpu.memory_space<vmem>>, vector<1x128xf32>
    %4 = vector.broadcast %3 : vector<1x128xf32> to vector<512x128xf32>
    %5 = arith.addf %2, %4 : vector<512x128xf32>
    %cst_5 = arith.constant 0.000000e+00 : f32
    %6 = vector.broadcast %cst_5 : f32 to vector<512x128xf32>
    %7 = arith.maximumf %5, %6 : vector<512x128xf32>
    %8 = arith.truncf %7 : vector<512x128xf32> to vector<512x128xbf16>
    %c0_6 = arith.constant 0 : index
    %c0_7 = arith.constant 0 : index
    %9 = vector.load %arg5[%c0_6, %c0_7] : memref<512x128xbf16, #tpu.memory_space<vmem>>, vector<512x128xbf16>
    tpu.vector_store %arg5[%c0_6, %c0_7], %8 {strides = array<i32>} : memref<512x128xbf16, #tpu.memory_space<vmem>>, vector<512x128xbf16>,
    return
  }
  func.func @transform_0(%arg0: i32, %arg1: i32) -> (i32, i32) {
    %c0_i32 = arith.constant 0 : i32
    %c0_i32_0 = arith.constant 0 : i32
    return %arg0, %c0_i32 : i32, i32
  }
  func.func @transform_1(%arg0: i32, %arg1: i32) -> (i32, i32) {
    %c0_i32 = arith.constant 0 : i32
    %c0_i32_0 = arith.constant 0 : i32
    return %c0_i32, %arg1 : i32, i32
  }
  func.func @transform_2(%arg0: i32, %arg1: i32) -> (i32, i32) {
    %c0_i32 = arith.constant 0 : i32
    %c0_i32_0 = arith.constant 0 : i32
    return %c0_i32, %arg1 : i32, i32
  }
  func.func @transform_3(%arg0: i32, %arg1: i32) -> (i32, i32) {
    %c0_i32 = arith.constant 0 : i32
    return %arg0, %arg1 : i32, i32
  }
}

module attributes {stable_mosaic.version = 11 : i64} {
  func.func @_mm_kernel(%arg0: i32, %arg1: i32, %arg2: memref<128x72xbf16, #tpu.memory_space<vmem>>, %arg3: memref<72x128xbf16, #tpu.memory_space<vmem>>, %arg4: memref<1x128xf32, #tpu.memory_space<vmem>>, %arg5: memref<128x128xbf16, #tpu.memory_space<vmem>>) attributes {dimension_semantics = [#tpu.dimension_semantics<parallel>, #tpu.dimension_semantics<parallel>], iteration_bounds = array<i64: 1, 1>, scalar_prefetch = 0 : i64, scratch_operands = 0 : i64, tpu.core_type = #tpu.core_type<tc>, window_params = [{transform_indices = @transform_0, window_bounds = array<i64: 128, 72>}, {transform_indices = @transform_1, window_bounds = array<i64: 72, 128>}, {transform_indices = @transform_2, window_bounds = array<i64: 1, 128>}, {transform_indices = @transform_3, window_bounds = array<i64: 128, 128>}]} {
    %c0 = arith.constant 0 : index
    %c0_0 = arith.constant 0 : index
    %0 = vector.load %arg2[%c0, %c0_0] : memref<128x72xbf16, #tpu.memory_space<vmem>>, vector<128x72xbf16>
    %c0_1 = arith.constant 0 : index
    %c0_2 = arith.constant 0 : index
    %1 = vector.load %arg3[%c0_1, %c0_2] : memref<72x128xbf16, #tpu.memory_space<vmem>>, vector<72x128xbf16>
    %cst = arith.constant dense<0.000000e+00> : vector<128x128xf32>
    %2 = tpu.matmul %0, %1, %cst {dimension_numbers = #tpu.dot_dimension_numbers<[1], [0], [0], [1], [0, 0, 1, 1], [], []>} : vector<128x72xbf16>, vector<72x128xbf16>, vector<128x128xf32> -> vector<128x128xf32>
    %c0_3 = arith.constant 0 : index
    %c0_4 = arith.constant 0 : index
    %3 = vector.load %arg4[%c0_3, %c0_4] : memref<1x128xf32, #tpu.memory_space<vmem>>, vector<1x128xf32>
    %4 = vector.broadcast %3 : vector<1x128xf32> to vector<128x128xf32>
    %5 = arith.addf %2, %4 : vector<128x128xf32>
    %cst_5 = arith.constant 0.000000e+00 : f32
    %6 = vector.broadcast %cst_5 : f32 to vector<128x128xf32>
    %7 = arith.maximumf %5, %6 : vector<128x128xf32>
    %8 = arith.truncf %7 : vector<128x128xf32> to vector<128x128xbf16>
    %c0_6 = arith.constant 0 : index
    %c0_7 = arith.constant 0 : index
    %9 = vector.load %arg5[%c0_6, %c0_7] : memref<128x128xbf16, #tpu.memory_space<vmem>>, vector<128x128xbf16>
    tpu.vector_store %arg5[%c0_6, %c0_7], %8 {strides = array<i32>} : memref<128x128xbf16, #tpu.memory_space<vmem>>, vector<128x128xbf16>,
    return
  }
  func.func @transform_0(%arg0: i32, %arg1: i32) -> (i32, i32) {
    %c0_i32 = arith.constant 0 : i32
    %c0_i32_0 = arith.constant 0 : i32
    return %arg0, %c0_i32 : i32, i32
  }
  func.func @transform_1(%arg0: i32, %arg1: i32) -> (i32, i32) {
    %c0_i32 = arith.constant 0 : i32
    %c0_i32_0 = arith.constant 0 : i32
    return %c0_i32, %arg1 : i32, i32
  }
  func.func @transform_2(%arg0: i32, %arg1: i32) -> (i32, i32) {
    %c0_i32 = arith.constant 0 : i32
    %c0_i32_0 = arith.constant 0 : i32
    return %c0_i32, %arg1 : i32, i32
  }
  func.func @transform_3(%arg0: i32, %arg1: i32) -> (i32, i32) {
    %c0_i32 = arith.constant 0 : i32
    return %arg0, %arg1 : i32, i32
  }
}

module attributes {stable_mosaic.version = 11 : i64} {
  func.func @_mm_kernel(%arg0: i32, %arg1: i32, %arg2: memref<128x128xbf16, #tpu.memory_space<vmem>>, %arg3: memref<128x128xbf16, #tpu.memory_space<vmem>>, %arg4: memref<1x128xf32, #tpu.memory_space<vmem>>, %arg5: memref<128x128xbf16, #tpu.memory_space<vmem>>) attributes {dimension_semantics = [#tpu.dimension_semantics<parallel>, #tpu.dimension_semantics<parallel>], iteration_bounds = array<i64: 1, 1>, scalar_prefetch = 0 : i64, scratch_operands = 0 : i64, tpu.core_type = #tpu.core_type<tc>, window_params = [{transform_indices = @transform_0, window_bounds = array<i64: 128, 128>}, {transform_indices = @transform_1, window_bounds = array<i64: 128, 128>}, {transform_indices = @transform_2, window_bounds = array<i64: 1, 128>}, {transform_indices = @transform_3, window_bounds = array<i64: 128, 128>}]} {
    %c0 = arith.constant 0 : index
    %c0_0 = arith.constant 0 : index
    %0 = vector.load %arg2[%c0, %c0_0] : memref<128x128xbf16, #tpu.memory_space<vmem>>, vector<128x128xbf16>
    %c0_1 = arith.constant 0 : index
    %c0_2 = arith.constant 0 : index
    %1 = vector.load %arg3[%c0_1, %c0_2] : memref<128x128xbf16, #tpu.memory_space<vmem>>, vector<128x128xbf16>
    %cst = arith.constant dense<0.000000e+00> : vector<128x128xf32>
    %2 = tpu.matmul %0, %1, %cst {dimension_numbers = #tpu.dot_dimension_numbers<[1], [0], [0], [1], [0, 0, 1, 1], [], []>} : vector<128x128xbf16>, vector<128x128xbf16>, vector<128x128xf32> -> vector<128x128xf32>
    %c0_3 = arith.constant 0 : index
    %c0_4 = arith.constant 0 : index
    %3 = vector.load %arg4[%c0_3, %c0_4] : memref<1x128xf32, #tpu.memory_space<vmem>>, vector<1x128xf32>
    %4 = vector.broadcast %3 : vector<1x128xf32> to vector<128x128xf32>
    %5 = arith.addf %2, %4 : vector<128x128xf32>
    %6 = arith.truncf %5 : vector<128x128xf32> to vector<128x128xbf16>
    %c0_5 = arith.constant 0 : index
    %c0_6 = arith.constant 0 : index
    %7 = vector.load %arg5[%c0_5, %c0_6] : memref<128x128xbf16, #tpu.memory_space<vmem>>, vector<128x128xbf16>
    tpu.vector_store %arg5[%c0_5, %c0_6], %6 {strides = array<i32>} : memref<128x128xbf16, #tpu.memory_space<vmem>>, vector<128x128xbf16>,
    return
  }
  func.func @transform_0(%arg0: i32, %arg1: i32) -> (i32, i32) {
    %c0_i32 = arith.constant 0 : i32
    %c0_i32_0 = arith.constant 0 : i32
    return %arg0, %c0_i32 : i32, i32
  }
  func.func @transform_1(%arg0: i32, %arg1: i32) -> (i32, i32) {
    %c0_i32 = arith.constant 0 : i32
    %c0_i32_0 = arith.constant 0 : i32
    return %c0_i32, %arg1 : i32, i32
  }
  func.func @transform_2(%arg0: i32, %arg1: i32) -> (i32, i32) {
    %c0_i32 = arith.constant 0 : i32
    %c0_i32_0 = arith.constant 0 : i32
    return %c0_i32, %arg1 : i32, i32
  }
  func.func @transform_3(%arg0: i32, %arg1: i32) -> (i32, i32) {
    %c0_i32 = arith.constant 0 : i32
    return %arg0, %arg1 : i32, i32
  }
}

module attributes {stable_mosaic.version = 11 : i64} {
  func.func @_mm_kernel(%arg0: i32, %arg1: i32, %arg2: memref<128x128xbf16, #tpu.memory_space<vmem>>, %arg3: memref<128x128xbf16, #tpu.memory_space<vmem>>, %arg4: memref<1x128xf32, #tpu.memory_space<vmem>>, %arg5: memref<128x128xbf16, #tpu.memory_space<vmem>>, %arg6: memref<128x128xf32, #tpu.memory_space<vmem>>) attributes {dimension_semantics = [#tpu.dimension_semantics<parallel>, #tpu.dimension_semantics<parallel>], iteration_bounds = array<i64: 1, 1>, scalar_prefetch = 0 : i64, scratch_operands = 0 : i64, tpu.core_type = #tpu.core_type<tc>, window_params = [{transform_indices = @transform_0, window_bounds = array<i64: 128, 128>}, {transform_indices = @transform_1, window_bounds = array<i64: 128, 128>}, {transform_indices = @transform_2, window_bounds = array<i64: 1, 128>}, {transform_indices = @transform_3, window_bounds = array<i64: 128, 128>}, {transform_indices = @transform_4, window_bounds = array<i64: 128, 128>}]} {
    %c0 = arith.constant 0 : index
    %c0_0 = arith.constant 0 : index
    %0 = vector.load %arg2[%c0, %c0_0] : memref<128x128xbf16, #tpu.memory_space<vmem>>, vector<128x128xbf16>
    %c0_1 = arith.constant 0 : index
    %c0_2 = arith.constant 0 : index
    %1 = vector.load %arg3[%c0_1, %c0_2] : memref<128x128xbf16, #tpu.memory_space<vmem>>, vector<128x128xbf16>
    %cst = arith.constant dense<0.000000e+00> : vector<128x128xf32>
    %2 = tpu.matmul %0, %1, %cst {dimension_numbers = #tpu.dot_dimension_numbers<[1], [0], [0], [1], [0, 0, 1, 1], [], []>} : vector<128x128xbf16>, vector<128x128xbf16>, vector<128x128xf32> -> vector<128x128xf32>
    %c0_3 = arith.constant 0 : index
    %c0_4 = arith.constant 0 : index
    %3 = vector.load %arg4[%c0_3, %c0_4] : memref<1x128xf32, #tpu.memory_space<vmem>>, vector<1x128xf32>
    %4 = vector.broadcast %3 : vector<1x128xf32> to vector<128x128xf32>
    %5 = arith.addf %2, %4 : vector<128x128xf32>
    %c0_5 = arith.constant 0 : index
    %c0_6 = arith.constant 0 : index
    %6 = vector.load %arg5[%c0_5, %c0_6] : memref<128x128xbf16, #tpu.memory_space<vmem>>, vector<128x128xbf16>
    %7 = arith.extf %6 : vector<128x128xbf16> to vector<128x128xf32>
    %8 = arith.addf %5, %7 : vector<128x128xf32>
    %cst_7 = arith.constant 0.000000e+00 : f32
    %9 = vector.broadcast %cst_7 : f32 to vector<128x128xf32>
    %10 = arith.maximumf %8, %9 : vector<128x128xf32>
    %c0_8 = arith.constant 0 : index
    %c0_9 = arith.constant 0 : index
    %11 = vector.load %arg6[%c0_8, %c0_9] : memref<128x128xf32, #tpu.memory_space<vmem>>, vector<128x128xf32>
    tpu.vector_store %arg6[%c0_8, %c0_9], %10 {strides = array<i32>} : memref<128x128xf32, #tpu.memory_space<vmem>>, vector<128x128xf32>,
    return
  }
  func.func @transform_0(%arg0: i32, %arg1: i32) -> (i32, i32) {
    %c0_i32 = arith.constant 0 : i32
    %c0_i32_0 = arith.constant 0 : i32
    return %arg0, %c0_i32 : i32, i32
  }
  func.func @transform_1(%arg0: i32, %arg1: i32) -> (i32, i32) {
    %c0_i32 = arith.constant 0 : i32
    %c0_i32_0 = arith.constant 0 : i32
    return %c0_i32, %arg1 : i32, i32
  }
  func.func @transform_2(%arg0: i32, %arg1: i32) -> (i32, i32) {
    %c0_i32 = arith.constant 0 : i32
    %c0_i32_0 = arith.constant 0 : i32
    return %c0_i32, %arg1 : i32, i32
  }
  func.func @transform_3(%arg0: i32, %arg1: i32) -> (i32, i32) {
    %c0_i32 = arith.constant 0 : i32
    return %arg0, %arg1 : i32, i32
  }
  func.func @transform_4(%arg0: i32, %arg1: i32) -> (i32, i32) {
    %c0_i32 = arith.constant 0 : i32
    return %arg0, %arg1 : i32, i32
  }
}

</mosaic_0001>

<llo_original>
// kernel: bottleneck_forward.4
$region0: #{bottleneck_forward.4}
  #allocation0 [shape = 'u32[]', space=smem, size = 0x4, offset = 0x4, fixed_abs, tag = 'smem constant byte address 0x4 - core index']
  #allocation1 [shape = 'u32[144,128]{1,0:T(1,128)}', space=vmem, size = 0x12000, scoped, tag = 'internal scratch']
  %s0 = inlined_call_operand.vmem [shape: bf16[512,128], index: 0, kind: input, shape index: {}]
  %s1 = inlined_call_operand.vmem [shape: bf16[128,128], index: 1, kind: input, shape index: {}]
  %s2 = inlined_call_operand.vmem [shape: f32[1,128], index: 2, kind: input, shape index: {}]
  %s3 = inlined_call_operand.vmem [shape: bf16[512,128], index: 3, kind: output, shape index: {}]
  %s4 = sld [smem:[#allocation0]]
  $region22: #{bottleneck_forward.4} parent=0
    _
  %s6 = ssub.s32 1, %s4
  %s7 = scalar_select 0, %s6, %s4
  // Predicated region
  $region2: #{bottleneck_forward.4} parent=0 // pred_check
    _
  $region3: #{bottleneck_forward.4} parent=0 // pred_check_branch
    %9 = sbr.rel (0) target = $region5
  $region4: #{bottleneck_forward.4} parent=0 // pred_region
    _
  $region5: #{bottleneck_forward.4} parent=0 // pred_fallthru
    _
  // Predicated region
  $region6: #{bottleneck_forward.4} parent=0 // pred_check
    _
  $region7: #{bottleneck_forward.4} parent=0 // pred_check_branch
    %11 = sbr.rel (0) target = $region9
  $region8: #{bottleneck_forward.4} parent=0 // pred_region
    _
  $region9: #{bottleneck_forward.4} parent=0 // pred_fallthru
    _
  // Predicated region
  $region10: #{bottleneck_forward.4} parent=0 // pred_check
    _
  $region11: #{bottleneck_forward.4} parent=0 // pred_check_branch
    %13 = sbr.rel (0) target = $region13
  $region12: #{bottleneck_forward.4} parent=0 // pred_region
    _
  $region13: #{bottleneck_forward.4} parent=0 // pred_fallthru
    _
  %v15 = vld [vmem:[%s0] sm:$0xf]
  %v16 = vld [vmem:[%s0 + $0x4] sm:$0xf]
  %v17 = vld [vmem:[%s0 + $0x8] sm:$0xf]
  %v18 = vld [vmem:[%s0 + $0xc] sm:$0xf]
  %v19 = vld [vmem:[%s0 + $0x10] sm:$0xf]
  %v20 = vld [vmem:[%s0 + $0x14] sm:$0xf]
  %v21 = vld [vmem:[%s0 + $0x18] sm:$0xf]
  %v22 = vld [vmem:[%s0 + $0x1c] sm:$0xf]
  %v23 = vld [vmem:[%s0 + $0x20] sm:$0xf]
  %v24 = vld [vmem:[%s0 + $0x24] sm:$0xf]
  %v25 = vld [vmem:[%s0 + $0x28] sm:$0xf]
  %v26 = vld [vmem:[%s0 + $0x2c] sm:$0xf]
  %v27 = vld [vmem:[%s0 + $0x30] sm:$0xf]
  %v28 = vld [vmem:[%s0 + $0x34] sm:$0xf]
  %v29 = vld [vmem:[%s0 + $0x38] sm:$0xf]
  %v30 = vld [vmem:[%s0 + $0x3c] sm:$0xf]
  %v31 = vld [vmem:[%s0 + $0x40] sm:$0xf]
  %v32 = vld [vmem:[%s0 + $0x44] sm:$0xf]
  %v33 = vld [vmem:[%s0 + $0x48] sm:$0xf]
  %v34 = vld [vmem:[%s0 + $0x4c] sm:$0xf]
  %v35 = vld [vmem:[%s0 + $0x50] sm:$0xf]
  %v36 = vld [vmem:[%s0 + $0x54] sm:$0xf]
  %v37 = vld [vmem:[%s0 + $0x58] sm:$0xf]
  %v38 = vld [vmem:[%s0 + $0x5c] sm:$0xf]
  %v39 = vld [vmem:[%s0 + $0x60] sm:$0xf]
  %v40 = vld [vmem:[%s0 + $0x64] sm:$0xf]
  %v41 = vld [vmem:[%s0 + $0x68] sm:$0xf]
  %v42 = vld [vmem:[%s0 + $0x6c] sm:$0xf]
  %v43 = vld [vmem:[%s0 + $0x70] sm:$0xf]
  %v44 = vld [vmem:[%s0 + $0x74] sm:$0xf]
  %v45 = vld [vmem:[%s0 + $0x78] sm:$0xf]
  %v46 = vld [vmem:[%s0 + $0x7c] sm:$0xf]
  %v47 = vld [vmem:[%s0 + $0x80] sm:$0xf]
  %v48 = vld [vmem:[%s0 + $0x84] sm:$0xf]
  %v49 = vld [vmem:[%s0 + $0x88] sm:$0xf]
  %v50 = vld [vmem:[%s0 + $0x8c] sm:$0xf]
  %v51 = vld [vmem:[%s0 + $0x90] sm:$0xf]
  %v52 = vld [vmem:[%s0 + $0x94] sm:$0xf]
  %v53 = vld [vmem:[%s0 + $0x98] sm:$0xf]
  %v54 = vld [vmem:[%s0 + $0x9c] sm:$0xf]
  %v55 = vld [vmem:[%s0 + $0xa0] sm:$0xf]
  %v56 = vld [vmem:[%s0 + $0xa4] sm:$0xf]
  %v57 = vld [vmem:[%s0 + $0xa8] sm:$0xf]
  %v58 = vld [vmem:[%s0 + $0xac] sm:$0xf]
  %v59 = vld [vmem:[%s0 + $0xb0] sm:$0xf]
  %v60 = vld [vmem:[%s0 + $0xb4] sm:$0xf]
  %v61 = vld [vmem:[%s0 + $0xb8] sm:$0xf]
  %v62 = vld [vmem:[%s0 + $0xbc] sm:$0xf]
  %v63 = vld [vmem:[%s0 + $0xc0] sm:$0xf]
  %v64 = vld [vmem:[%s0 + $0xc4] sm:$0xf]
  %v65 = vld [vmem:[%s0 + $0xc8] sm:$0xf]
  %v66 = vld [vmem:[%s0 + $0xcc] sm:$0xf]
  %v67 = vld [vmem:[%s0 + $0xd0] sm:$0xf]
  %v68 = vld [vmem:[%s0 + $0xd4] sm:$0xf]
  %v69 = vld [vmem:[%s0 + $0xd8] sm:$0xf]
  %v70 = vld [vmem:[%s0 + $0xdc] sm:$0xf]
  %v71 = vld [vmem:[%s0 + $0xe0] sm:$0xf]
  %v72 = vld [vmem:[%s0 + $0xe4] sm:$0xf]
  %v73 = vld [vmem:[%s0 + $0xe8] sm:$0xf]
  %v74 = vld [vmem:[%s0 + $0xec] sm:$0xf]
  %v75 = vld [vmem:[%s0 + $0xf0] sm:$0xf]
  %v76 = vld [vmem:[%s0 + $0xf4] sm:$0xf]
  %v77 = vld [vmem:[%s0 + $0xf8] sm:$0xf]
  %v78 = vld [vmem:[%s0 + $0xfc] sm:$0xf]
  %v79 = vld [vmem:[%s1] sm:$0xf]
  %v80 = vld [vmem:[%s1 + $0x4] sm:$0xf]
  %v81 = vld [vmem:[%s1 + $0x8] sm:$0xf]
  %v82 = vld [vmem:[%s1 + $0xc] sm:$0xf]
  %v83 = vld [vmem:[%s1 + $0x10] sm:$0xf]
  %v84 = vld [vmem:[%s1 + $0x14] sm:$0xf]
  %v85 = vld [vmem:[%s1 + $0x18] sm:$0xf]
  %v86 = vld [vmem:[%s1 + $0x1c] sm:$0xf]
  %v87 = vld [vmem:[%s1 + $0x20] sm:$0xf]
  %v88 = vld [vmem:[%s1 + $0x24] sm:$0xf]
  %v89 = vld [vmem:[%s1 + $0x28] sm:$0xf]
  %v90 = vld [vmem:[%s1 + $0x2c] sm:$0xf]
  %v91 = vld [vmem:[%s1 + $0x30] sm:$0xf]
  %v92 = vld [vmem:[%s1 + $0x34] sm:$0xf]
  %v93 = vld [vmem:[%s1 + $0x38] sm:$0xf]
  %v94 = vld [vmem:[%s1 + $0x3c] sm:$0xf]
  %v95 = vld [vmem:[%s2] sm:$0x1]
  %v97 = vlaneseq
  %v98 = vshrl.u32 %v97, 7
  %v99 = vsub.s32 0, %v98
  %v100 = vrot.slane %v95, %v99
  %v166 = vunpack.c.l.b16 %v15
  %v167 = vunpack.c.l.b16 %v16
  %v168 = vunpack.c.l.b16 %v17
  %v169 = vunpack.c.l.b16 %v18
  %v170 = vunpack.c.l.b16 %v19
  %v171 = vunpack.c.l.b16 %v20
  %v172 = vunpack.c.l.b16 %v21
  %v173 = vunpack.c.l.b16 %v22
  %v174 = vunpack.c.l.b16 %v23
  %v175 = vunpack.c.l.b16 %v24
  %v176 = vunpack.c.l.b16 %v25
  %v177 = vunpack.c.l.b16 %v26
  %v178 = vunpack.c.l.b16 %v27
  %v179 = vunpack.c.l.b16 %v28
  %v180 = vunpack.c.l.b16 %v29
  %v181 = vunpack.c.l.b16 %v30
  %v182 = vunpack.c.l.b16 %v31
  %v183 = vunpack.c.l.b16 %v32
  %v184 = vunpack.c.l.b16 %v33
  %v185 = vunpack.c.l.b16 %v34
  %v186 = vunpack.c.l.b16 %v35
  %v187 = vunpack.c.l.b16 %v36
  %v188 = vunpack.c.l.b16 %v37
  %v189 = vunpack.c.l.b16 %v38
  %v190 = vunpack.c.l.b16 %v39
  %v191 = vunpack.c.l.b16 %v40
  %v192 = vunpack.c.l.b16 %v41
  %v193 = vunpack.c.l.b16 %v42
  %v194 = vunpack.c.l.b16 %v43
  %v195 = vunpack.c.l.b16 %v44
  %v196 = vunpack.c.l.b16 %v45
  %v197 = vunpack.c.l.b16 %v46
  %v198 = vunpack.c.l.b16 %v47
  %v199 = vunpack.c.l.b16 %v48
  %v200 = vunpack.c.l.b16 %v49
  %v201 = vunpack.c.l.b16 %v50
  %v202 = vunpack.c.l.b16 %v51
  %v203 = vunpack.c.l.b16 %v52
  %v204 = vunpack.c.l.b16 %v53
  %v205 = vunpack.c.l.b16 %v54
  %v206 = vunpack.c.l.b16 %v55
  %v207 = vunpack.c.l.b16 %v56
  %v208 = vunpack.c.l.b16 %v57
  %v209 = vunpack.c.l.b16 %v58
  %v210 = vunpack.c.l.b16 %v59
  %v211 = vunpack.c.l.b16 %v60
  %v212 = vunpack.c.l.b16 %v61
  %v213 = vunpack.c.l.b16 %v62
  %v214 = vunpack.c.l.b16 %v63
  %v215 = vunpack.c.l.b16 %v64
  %v216 = vunpack.c.l.b16 %v65
  %v217 = vunpack.c.l.b16 %v66
  %v218 = vunpack.c.l.b16 %v67
  %v219 = vunpack.c.l.b16 %v68
  %v220 = vunpack.c.l.b16 %v69
  %v221 = vunpack.c.l.b16 %v70
  %v222 = vunpack.c.l.b16 %v71
  %v223 = vunpack.c.l.b16 %v72
  %v224 = vunpack.c.l.b16 %v73
  %v225 = vunpack.c.l.b16 %v74
  %v226 = vunpack.c.l.b16 %v75
  %v227 = vunpack.c.l.b16 %v76
  %v228 = vunpack.c.l.b16 %v77
  %v229 = vunpack.c.l.b16 %v78
  %v230 = vpack.c.b16 %v167, %v166
  %v231 = vpack.c.b16 %v169, %v168
  %v232 = vpack.c.b16 %v171, %v170
  %v233 = vpack.c.b16 %v173, %v172
  %v234 = vpack.c.b16 %v175, %v174
  %v235 = vpack.c.b16 %v177, %v176
  %v236 = vpack.c.b16 %v179, %v178
  %v237 = vpack.c.b16 %v181, %v180
  %v238 = vpack.c.b16 %v183, %v182
  %v239 = vpack.c.b16 %v185, %v184
  %v240 = vpack.c.b16 %v187, %v186
  %v241 = vpack.c.b16 %v189, %v188
  %v242 = vpack.c.b16 %v191, %v190
  %v243 = vpack.c.b16 %v193, %v192
  %v244 = vpack.c.b16 %v195, %v194
  %v245 = vpack.c.b16 %v197, %v196
  %v246 = vpack.c.b16 %v199, %v198
  %v247 = vpack.c.b16 %v201, %v200
  %v248 = vpack.c.b16 %v203, %v202
  %v249 = vpack.c.b16 %v205, %v204
  %v250 = vpack.c.b16 %v207, %v206
  %v251 = vpack.c.b16 %v209, %v208
  %v252 = vpack.c.b16 %v211, %v210
  %v253 = vpack.c.b16 %v213, %v212
  %v254 = vpack.c.b16 %v215, %v214
  %v255 = vpack.c.b16 %v217, %v216
  %v256 = vpack.c.b16 %v219, %v218
  %v257 = vpack.c.b16 %v221, %v220
  %v258 = vpack.c.b16 %v223, %v222
  %v259 = vpack.c.b16 %v225, %v224
  %v260 = vpack.c.b16 %v227, %v226
  %v261 = vpack.c.b16 %v229, %v228
  %v310 = vunpack.c.l.b16 %v79
  %v311 = vunpack.c.l.b16 %v80
  %v312 = vunpack.c.l.b16 %v81
  %v313 = vunpack.c.l.b16 %v82
  %v314 = vunpack.c.l.b16 %v83
  %v315 = vunpack.c.l.b16 %v84
  %v316 = vunpack.c.l.b16 %v85
  %v317 = vunpack.c.l.b16 %v86
  %v318 = vunpack.c.l.b16 %v87
  %v319 = vunpack.c.l.b16 %v88
  %v320 = vunpack.c.l.b16 %v89
  %v321 = vunpack.c.l.b16 %v90
  %v322 = vunpack.c.l.b16 %v91
  %v323 = vunpack.c.l.b16 %v92
  %v324 = vunpack.c.l.b16 %v93
  %v325 = vunpack.c.l.b16 %v94
  %v326 = vpack.c.b16 %v311, %v310
  %v327 = vpack.c.b16 %v313, %v312
  %v328 = vpack.c.b16 %v315, %v314
  %v329 = vpack.c.b16 %v317, %v316
  %v330 = vpack.c.b16 %v319, %v318
  %v331 = vpack.c.b16 %v321, %v320
  %v332 = vpack.c.b16 %v323, %v322
  %v333 = vpack.c.b16 %v325, %v324
  %342 = vmatprep.subr.bf16.mxu0 0
  %343 = vmatpush1.bf16.msra.mxu0 %v333
  %344 = vmatprep.subr.bf16.mxu0 0
  %345 = vmatpush1.bf16.msra.mxu0 %v332
  %346 = vmatprep.subr.bf16.mxu0 0
  %347 = vmatpush1.bf16.msra.mxu0 %v331
  %348 = vmatprep.subr.bf16.mxu0 0
  %349 = vmatpush1.bf16.msra.mxu0 %v330
  %350 = vmatprep.subr.bf16.mxu0 0
  %351 = vmatpush1.bf16.msra.mxu0 %v329
  %352 = vmatprep.subr.bf16.mxu0 0
  %353 = vmatpush1.bf16.msra.mxu0 %v328
  %354 = vmatprep.subr.bf16.mxu0 0
  %355 = vmatpush1.bf16.msra.mxu0 %v327
  %356 = vmatprep.subr.bf16.mxu0 0
  %357 = vmatpush1.bf16.msra.mxu0 %v326
  %358 = vmatprep.subr.bf16.mxu0 0
  %359 = vmatpush2.bf16.msra.mxu0 0
  %360 = vmatprep.subr.bf16.mxu0 0
  %361 = vmatpush2.bf16.msra.mxu0 0
  %362 = vmatprep.subr.bf16.mxu0 0
  %363 = vmatpush2.bf16.msra.mxu0 0
  %364 = vmatprep.subr.bf16.mxu0 0
  %365 = vmatpush2.bf16.msra.mxu0 0
  %366 = vmatprep.subr.bf16.mxu0 0
  %367 = vmatpush2.bf16.msra.mxu0 0
  %368 = vmatprep.subr.bf16.mxu0 0
  %369 = vmatpush2.bf16.msra.mxu0 0
  %370 = vmatprep.subr.bf16.mxu0 0
  %371 = vmatpush2.bf16.msra.mxu0 0
  %372 = vmatprep.subr.bf16.mxu0 0
  %373 = vmatpush2.bf16.msra.mxu0 0
  %374 = vmatprep.mubr.bf16.mxu0 0
  %375 = vmatmul.mubr.bf16.gmra.mxu0 %v230
  %v376 = vpop.f32.mrf.mxu0
  %v377 = vadd.f32 %v100, %v376
  %v378 = vpop.f32.mrf.mxu0
  %v379 = vpop.f32.mrf.mxu0
  %v380 = vadd.f32 %v100, %v379
  %v381 = vpop.f32.mrf.mxu0
  %382 = vmatprep.mubr.bf16.mxu0 0
  %383 = vmatmul.mubr.bf16.gmra.mxu0 %v231
  %v384 = vpop.f32.mrf.mxu0
  %v385 = vadd.f32 %v100, %v384
  %v386 = vpop.f32.mrf.mxu0
  %v387 = vpop.f32.mrf.mxu0
  %v388 = vadd.f32 %v100, %v387
  %v389 = vpop.f32.mrf.mxu0
  %390 = vmatprep.mubr.bf16.mxu0 0
  %391 = vmatmul.mubr.bf16.gmra.mxu0 %v232
  %v392 = vpop.f32.mrf.mxu0
  %v393 = vadd.f32 %v100, %v392
  %v394 = vpop.f32.mrf.mxu0
  %v395 = vpop.f32.mrf.mxu0
  %v396 = vadd.f32 %v100, %v395
  %v397 = vpop.f32.mrf.mxu0
  %398 = vmatprep.mubr.bf16.mxu0 0
  %399 = vmatmul.mubr.bf16.gmra.mxu0 %v233
  %v400 = vpop.f32.mrf.mxu0
  %v401 = vadd.f32 %v100, %v400
  %v402 = vpop.f32.mrf.mxu0
  %v403 = vpop.f32.mrf.mxu0
  %v404 = vadd.f32 %v100, %v403
  %v405 = vpop.f32.mrf.mxu0
  %406 = vmatprep.mubr.bf16.mxu0 0
  %407 = vmatmul.mubr.bf16.gmra.mxu0 %v234
  %v408 = vpop.f32.mrf.mxu0
  %v409 = vadd.f32 %v100, %v408
  %v410 = vpop.f32.mrf.mxu0
  %v411 = vpop.f32.mrf.mxu0
  %v412 = vadd.f32 %v100, %v411
  %v413 = vpop.f32.mrf.mxu0
  %414 = vmatprep.mubr.bf16.mxu0 0
  %415 = vmatmul.mubr.bf16.gmra.mxu0 %v235
  %v416 = vpop.f32.mrf.mxu0
  %v417 = vadd.f32 %v100, %v416
  %v418 = vpop.f32.mrf.mxu0
  %v419 = vpop.f32.mrf.mxu0
  %v420 = vadd.f32 %v100, %v419
  %v421 = vpop.f32.mrf.mxu0
  %422 = vmatprep.mubr.bf16.mxu0 0
  %423 = vmatmul.mubr.bf16.gmra.mxu0 %v236
  %v424 = vpop.f32.mrf.mxu0
  %v425 = vadd.f32 %v100, %v424
  %v426 = vpop.f32.mrf.mxu0
  %v427 = vpop.f32.mrf.mxu0
  %v428 = vadd.f32 %v100, %v427
  %v429 = vpop.f32.mrf.mxu0
  %430 = vmatprep.mubr.bf16.mxu0 0
  %431 = vmatmul.mubr.bf16.gmra.mxu0 %v237
  %v432 = vpop.f32.mrf.mxu0
  %v433 = vadd.f32 %v100, %v432
  %v434 = vpop.f32.mrf.mxu0
  %v435 = vpop.f32.mrf.mxu0
  %v436 = vadd.f32 %v100, %v435
  %v437 = vpop.f32.mrf.mxu0
  %438 = vmatprep.mubr.bf16.mxu0 0
  %439 = vmatmul.mubr.bf16.gmra.mxu0 %v238
  %v440 = vpop.f32.mrf.mxu0
  %v441 = vadd.f32 %v100, %v440
  %v442 = vpop.f32.mrf.mxu0
  %v443 = vpop.f32.mrf.mxu0
  %v444 = vadd.f32 %v100, %v443
  %v445 = vpop.f32.mrf.mxu0
  %446 = vmatprep.mubr.bf16.mxu0 0
  %447 = vmatmul.mubr.bf16.gmra.mxu0 %v239
  %v448 = vpop.f32.mrf.mxu0
  %v449 = vadd.f32 %v100, %v448
  %v450 = vpop.f32.mrf.mxu0
  %v451 = vpop.f32.mrf.mxu0
  %v452 = vadd.f32 %v100, %v451
  %v453 = vpop.f32.mrf.mxu0
  %454 = vmatprep.mubr.bf16.mxu0 0
  %455 = vmatmul.mubr.bf16.gmra.mxu0 %v240
  %v456 = vpop.f32.mrf.mxu0
  %v457 = vadd.f32 %v100, %v456
  %v458 = vpop.f32.mrf.mxu0
  %v459 = vpop.f32.mrf.mxu0
  %v460 = vadd.f32 %v100, %v459
  %v461 = vpop.f32.mrf.mxu0
  %462 = vmatprep.mubr.bf16.mxu0 0
  %463 = vmatmul.mubr.bf16.gmra.mxu0 %v241
  %v464 = vpop.f32.mrf.mxu0
  %v465 = vadd.f32 %v100, %v464
  %v466 = vpop.f32.mrf.mxu0
  %v467 = vpop.f32.mrf.mxu0
  %v468 = vadd.f32 %v100, %v467
  %v469 = vpop.f32.mrf.mxu0
  %470 = vmatprep.mubr.bf16.mxu0 0
  %471 = vmatmul.mubr.bf16.gmra.mxu0 %v242
  %v472 = vpop.f32.mrf.mxu0
  %v473 = vadd.f32 %v100, %v472
  %v474 = vpop.f32.mrf.mxu0
  %v475 = vpop.f32.mrf.mxu0
  %v476 = vadd.f32 %v100, %v475
  %v477 = vpop.f32.mrf.mxu0
  %478 = vmatprep.mubr.bf16.mxu0 0
  %479 = vmatmul.mubr.bf16.gmra.mxu0 %v243
  %v480 = vpop.f32.mrf.mxu0
  %v481 = vadd.f32 %v100, %v480
  %v482 = vpop.f32.mrf.mxu0
  %v483 = vpop.f32.mrf.mxu0
  %v484 = vadd.f32 %v100, %v483
  %v485 = vpop.f32.mrf.mxu0
  %486 = vmatprep.mubr.bf16.mxu0 0
  %487 = vmatmul.mubr.bf16.gmra.mxu0 %v244
  %v488 = vpop.f32.mrf.mxu0
  %v489 = vadd.f32 %v100, %v488
  %v490 = vpop.f32.mrf.mxu0
  %v491 = vpop.f32.mrf.mxu0
  %v492 = vadd.f32 %v100, %v491
  %v493 = vpop.f32.mrf.mxu0
  %494 = vmatprep.mubr.bf16.mxu0 0
  %495 = vmatmul.mubr.bf16.gmra.mxu0 %v245
  %v496 = vpop.f32.mrf.mxu0
  %v497 = vadd.f32 %v100, %v496
  %v498 = vpop.f32.mrf.mxu0
  %v499 = vpop.f32.mrf.mxu0
  %v500 = vadd.f32 %v100, %v499
  %v501 = vpop.f32.mrf.mxu0
  %502 = vmatprep.mubr.bf16.mxu0 0
  %503 = vmatmul.mubr.bf16.gmra.mxu0 %v246
  %v504 = vpop.f32.mrf.mxu0
  %v505 = vadd.f32 %v100, %v504
  %v506 = vpop.f32.mrf.mxu0
  %v507 = vpop.f32.mrf.mxu0
  %v508 = vadd.f32 %v100, %v507
  %v509 = vpop.f32.mrf.mxu0
  %510 = vmatprep.mubr.bf16.mxu0 0
  %511 = vmatmul.mubr.bf16.gmra.mxu0 %v247
  %v512 = vpop.f32.mrf.mxu0
  %v513 = vadd.f32 %v100, %v512
  %v514 = vpop.f32.mrf.mxu0
  %v515 = vpop.f32.mrf.mxu0
  %v516 = vadd.f32 %v100, %v515
  %v517 = vpop.f32.mrf.mxu0
  %518 = vmatprep.mubr.bf16.mxu0 0
  %519 = vmatmul.mubr.bf16.gmra.mxu0 %v248
  %v520 = vpop.f32.mrf.mxu0
  %v521 = vadd.f32 %v100, %v520
  %v522 = vpop.f32.mrf.mxu0
  %v523 = vpop.f32.mrf.mxu0
  %v524 = vadd.f32 %v100, %v523
  %v525 = vpop.f32.mrf.mxu0
  %526 = vmatprep.mubr.bf16.mxu0 0
  %527 = vmatmul.mubr.bf16.gmra.mxu0 %v249
  %v528 = vpop.f32.mrf.mxu0
  %v529 = vadd.f32 %v100, %v528
  %v530 = vpop.f32.mrf.mxu0
  %v531 = vpop.f32.mrf.mxu0
  %v532 = vadd.f32 %v100, %v531
  %v533 = vpop.f32.mrf.mxu0
  %534 = vmatprep.mubr.bf16.mxu0 0
  %535 = vmatmul.mubr.bf16.gmra.mxu0 %v250
  %v536 = vpop.f32.mrf.mxu0
  %v537 = vadd.f32 %v100, %v536
  %v538 = vpop.f32.mrf.mxu0
  %v539 = vpop.f32.mrf.mxu0
  %v540 = vadd.f32 %v100, %v539
  %v541 = vpop.f32.mrf.mxu0
  %542 = vmatprep.mubr.bf16.mxu0 0
  %543 = vmatmul.mubr.bf16.gmra.mxu0 %v251
  %v544 = vpop.f32.mrf.mxu0
  %v545 = vadd.f32 %v100, %v544
  %v546 = vpop.f32.mrf.mxu0
  %v547 = vpop.f32.mrf.mxu0
  %v548 = vadd.f32 %v100, %v547
  %v549 = vpop.f32.mrf.mxu0
  %550 = vmatprep.mubr.bf16.mxu0 0
  %551 = vmatmul.mubr.bf16.gmra.mxu0 %v252
  %v552 = vpop.f32.mrf.mxu0
  %v553 = vadd.f32 %v100, %v552
  %v554 = vpop.f32.mrf.mxu0
  %v555 = vpop.f32.mrf.mxu0
  %v556 = vadd.f32 %v100, %v555
  %v557 = vpop.f32.mrf.mxu0
  %558 = vmatprep.mubr.bf16.mxu0 0
  %559 = vmatmul.mubr.bf16.gmra.mxu0 %v253
  %v560 = vpop.f32.mrf.mxu0
  %v561 = vadd.f32 %v100, %v560
  %v562 = vpop.f32.mrf.mxu0
  %v563 = vpop.f32.mrf.mxu0
  %v564 = vadd.f32 %v100, %v563
  %v565 = vpop.f32.mrf.mxu0
  %566 = vmatprep.mubr.bf16.mxu0 0
  %567 = vmatmul.mubr.bf16.gmra.mxu0 %v254
  %v568 = vpop.f32.mrf.mxu0
  %v569 = vadd.f32 %v100, %v568
  %v570 = vpop.f32.mrf.mxu0
  %v571 = vpop.f32.mrf.mxu0
  %v572 = vadd.f32 %v100, %v571
  %v573 = vpop.f32.mrf.mxu0
  %574 = vmatprep.mubr.bf16.mxu0 0
  %575 = vmatmul.mubr.bf16.gmra.mxu0 %v255
  %v576 = vpop.f32.mrf.mxu0
  %v577 = vadd.f32 %v100, %v576
  %v578 = vpop.f32.mrf.mxu0
  %v579 = vpop.f32.mrf.mxu0
  %v580 = vadd.f32 %v100, %v579
  %v581 = vpop.f32.mrf.mxu0
  %582 = vmatprep.mubr.bf16.mxu0 0
  %583 = vmatmul.mubr.bf16.gmra.mxu0 %v256
  %v584 = vpop.f32.mrf.mxu0
  %v585 = vadd.f32 %v100, %v584
  %v586 = vpop.f32.mrf.mxu0
  %v587 = vpop.f32.mrf.mxu0
  %v588 = vadd.f32 %v100, %v587
  %v589 = vpop.f32.mrf.mxu0
  %590 = vmatprep.mubr.bf16.mxu0 0
  %591 = vmatmul.mubr.bf16.gmra.mxu0 %v257
  %v592 = vpop.f32.mrf.mxu0
  %v593 = vadd.f32 %v100, %v592
  %v594 = vpop.f32.mrf.mxu0
  %v595 = vpop.f32.mrf.mxu0
  %v596 = vadd.f32 %v100, %v595
  %v597 = vpop.f32.mrf.mxu0
  %598 = vmatprep.mubr.bf16.mxu0 0
  %599 = vmatmul.mubr.bf16.gmra.mxu0 %v258
  %v600 = vpop.f32.mrf.mxu0
  %v601 = vadd.f32 %v100, %v600
  %v602 = vpop.f32.mrf.mxu0
  %v603 = vpop.f32.mrf.mxu0
  %v604 = vadd.f32 %v100, %v603
  %v605 = vpop.f32.mrf.mxu0
  %606 = vmatprep.mubr.bf16.mxu0 0
  %607 = vmatmul.mubr.bf16.gmra.mxu0 %v259
  %v608 = vpop.f32.mrf.mxu0
  %v609 = vadd.f32 %v100, %v608
  %v610 = vpop.f32.mrf.mxu0
  %v611 = vpop.f32.mrf.mxu0
  %v612 = vadd.f32 %v100, %v611
  %v613 = vpop.f32.mrf.mxu0
  %614 = vmatprep.mubr.bf16.mxu0 0
  %615 = vmatmul.mubr.bf16.gmra.mxu0 %v260
  %v616 = vpop.f32.mrf.mxu0
  %v617 = vadd.f32 %v100, %v616
  %v618 = vpop.f32.mrf.mxu0
  %v619 = vpop.f32.mrf.mxu0
  %v620 = vadd.f32 %v100, %v619
  %v621 = vpop.f32.mrf.mxu0
  %622 = vmatprep.mubr.bf16.mxu0 0
  %623 = vmatmul.mubr.bf16.gmra.mxu0 %v261
  %v624 = vpop.f32.mrf.mxu0
  %v625 = vadd.f32 %v100, %v624
  %v626 = vpop.f32.mrf.mxu0
  %v627 = vpop.f32.mrf.mxu0
  %v628 = vadd.f32 %v100, %v627
  %v629 = vpop.f32.mrf.mxu0
  %630 = vdwg.mxu0
  %v631 = vmax.f32 %v377, 0.0
  %v632 = vmax.f32 %v380, 0.0
  %v633 = vmax.f32 %v385, 0.0
  %v634 = vmax.f32 %v388, 0.0
  %v635 = vmax.f32 %v393, 0.0
  %v636 = vmax.f32 %v396, 0.0
  %v637 = vmax.f32 %v401, 0.0
  %v638 = vmax.f32 %v404, 0.0
  %v639 = vmax.f32 %v409, 0.0
  %v640 = vmax.f32 %v412, 0.0
  %v641 = vmax.f32 %v417, 0.0
  %v642 = vmax.f32 %v420, 0.0
  %v643 = vmax.f32 %v425, 0.0
  %v644 = vmax.f32 %v428, 0.0
  %v645 = vmax.f32 %v433, 0.0
  %v646 = vmax.f32 %v436, 0.0
  %v647 = vmax.f32 %v441, 0.0
  %v648 = vmax.f32 %v444, 0.0
  %v649 = vmax.f32 %v449, 0.0
  %v650 = vmax.f32 %v452, 0.0
  %v651 = vmax.f32 %v457, 0.0
  %v652 = vmax.f32 %v460, 0.0
  %v653 = vmax.f32 %v465, 0.0
  %v654 = vmax.f32 %v468, 0.0
  %v655 = vmax.f32 %v473, 0.0
  %v656 = vmax.f32 %v476, 0.0
  %v657 = vmax.f32 %v481, 0.0
  %v658 = vmax.f32 %v484, 0.0
  %v659 = vmax.f32 %v489, 0.0
  %v660 = vmax.f32 %v492, 0.0
  %v661 = vmax.f32 %v497, 0.0
  %v662 = vmax.f32 %v500, 0.0
  %v663 = vmax.f32 %v505, 0.0
  %v664 = vmax.f32 %v508, 0.0
  %v665 = vmax.f32 %v513, 0.0
  %v666 = vmax.f32 %v516, 0.0
  %v667 = vmax.f32 %v521, 0.0
  %v668 = vmax.f32 %v524, 0.0
  %v669 = vmax.f32 %v529, 0.0
  %v670 = vmax.f32 %v532, 0.0
  %v671 = vmax.f32 %v537, 0.0
  %v672 = vmax.f32 %v540, 0.0
  %v673 = vmax.f32 %v545, 0.0
  %v674 = vmax.f32 %v548, 0.0
  %v675 = vmax.f32 %v553, 0.0
  %v676 = vmax.f32 %v556, 0.0
  %v677 = vmax.f32 %v561, 0.0
  %v678 = vmax.f32 %v564, 0.0
  %v679 = vmax.f32 %v569, 0.0
  %v680 = vmax.f32 %v572, 0.0
  %v681 = vmax.f32 %v577, 0.0
  %v682 = vmax.f32 %v580, 0.0
  %v683 = vmax.f32 %v585, 0.0
  %v684 = vmax.f32 %v588, 0.0
  %v685 = vmax.f32 %v593, 0.0
  %v686 = vmax.f32 %v596, 0.0
  %v687 = vmax.f32 %v601, 0.0
  %v688 = vmax.f32 %v604, 0.0
  %v689 = vmax.f32 %v609, 0.0
  %v690 = vmax.f32 %v612, 0.0
  %v691 = vmax.f32 %v617, 0.0
  %v692 = vmax.f32 %v620, 0.0
  %v693 = vmax.f32 %v625, 0.0
  %v694 = vmax.f32 %v628, 0.0
  %v695 = vpack.c.bf16 %v632, %v631
  %v696 = vpack.c.bf16 %v634, %v633
  %v697 = vpack.c.bf16 %v636, %v635
  %v698 = vpack.c.bf16 %v638, %v637
  %v699 = vpack.c.bf16 %v640, %v639
  %v700 = vpack.c.bf16 %v642, %v641
  %v701 = vpack.c.bf16 %v644, %v643
  %v702 = vpack.c.bf16 %v646, %v645
  %v703 = vpack.c.bf16 %v648, %v647
  %v704 = vpack.c.bf16 %v650, %v649
  %v705 = vpack.c.bf16 %v652, %v651
  %v706 = vpack.c.bf16 %v654, %v653
  %v707 = vpack.c.bf16 %v656, %v655
  %v708 = vpack.c.bf16 %v658, %v657
  %v709 = vpack.c.bf16 %v660, %v659
  %v710 = vpack.c.bf16 %v662, %v661
  %v711 = vpack.c.bf16 %v664, %v663
  %v712 = vpack.c.bf16 %v666, %v665
  %v713 = vpack.c.bf16 %v668, %v667
  %v714 = vpack.c.bf16 %v670, %v669
  %v715 = vpack.c.bf16 %v672, %v671
  %v716 = vpack.c.bf16 %v674, %v673
  %v717 = vpack.c.bf16 %v676, %v675
  %v718 = vpack.c.bf16 %v678, %v677
  %v719 = vpack.c.bf16 %v680, %v679
  %v720 = vpack.c.bf16 %v682, %v681
  %v721 = vpack.c.bf16 %v684, %v683
  %v722 = vpack.c.bf16 %v686, %v685
  %v723 = vpack.c.bf16 %v688, %v687
  %v724 = vpack.c.bf16 %v690, %v689
  %v725 = vpack.c.bf16 %v692, %v691
  %v726 = vpack.c.bf16 %v694, %v693
  %v759 = vunpack.c.l.b16 %v695
  %v760 = vunpack.c.h.b16 %v695
  %v761 = vunpack.c.l.b16 %v696
  %v762 = vunpack.c.h.b16 %v696
  %v763 = vunpack.c.l.b16 %v697
  %v764 = vunpack.c.h.b16 %v697
  %v765 = vunpack.c.l.b16 %v698
  %v766 = vunpack.c.h.b16 %v698
  %v767 = vunpack.c.l.b16 %v699
  %v768 = vunpack.c.h.b16 %v699
  %v769 = vunpack.c.l.b16 %v700
  %v770 = vunpack.c.h.b16 %v700
  %v771 = vunpack.c.l.b16 %v701
  %v772 = vunpack.c.h.b16 %v701
  %v773 = vunpack.c.l.b16 %v702
  %v774 = vunpack.c.h.b16 %v702
  %v775 = vunpack.c.l.b16 %v703
  %v776 = vunpack.c.h.b16 %v703
  %v777 = vunpack.c.l.b16 %v704
  %v778 = vunpack.c.h.b16 %v704
  %v779 = vunpack.c.l.b16 %v705
  %v780 = vunpack.c.h.b16 %v705
  %v781 = vunpack.c.l.b16 %v706
  %v782 = vunpack.c.h.b16 %v706
  %v783 = vunpack.c.l.b16 %v707
  %v784 = vunpack.c.h.b16 %v707
  %v785 = vunpack.c.l.b16 %v708
  %v786 = vunpack.c.h.b16 %v708
  %v787 = vunpack.c.l.b16 %v709
  %v788 = vunpack.c.h.b16 %v709
  %v789 = vunpack.c.l.b16 %v710
  %v790 = vunpack.c.h.b16 %v710
  %v791 = vunpack.c.l.b16 %v711
  %v792 = vunpack.c.h.b16 %v711
  %v793 = vunpack.c.l.b16 %v712
  %v794 = vunpack.c.h.b16 %v712
  %v795 = vunpack.c.l.b16 %v713
  %v796 = vunpack.c.h.b16 %v713
  %v797 = vunpack.c.l.b16 %v714
  %v798 = vunpack.c.h.b16 %v714
  %v799 = vunpack.c.l.b16 %v715
  %v800 = vunpack.c.h.b16 %v715
  %v801 = vunpack.c.l.b16 %v716
  %v802 = vunpack.c.h.b16 %v716
  %v803 = vunpack.c.l.b16 %v717
  %v804 = vunpack.c.h.b16 %v717
  %v805 = vunpack.c.l.b16 %v718
  %v806 = vunpack.c.h.b16 %v718
  %v807 = vunpack.c.l.b16 %v719
  %v808 = vunpack.c.h.b16 %v719
  %v809 = vunpack.c.l.b16 %v720
  %v810 = vunpack.c.h.b16 %v720
  %v811 = vunpack.c.l.b16 %v721
  %v812 = vunpack.c.h.b16 %v721
  %v813 = vunpack.c.l.b16 %v722
  %v814 = vunpack.c.h.b16 %v722
  %v815 = vunpack.c.l.b16 %v723
  %v816 = vunpack.c.h.b16 %v723
  %v817 = vunpack.c.l.b16 %v724
  %v818 = vunpack.c.h.b16 %v724
  %v819 = vunpack.c.l.b16 %v725
  %v820 = vunpack.c.h.b16 %v725
  %v821 = vunpack.c.l.b16 %v726
  %v822 = vunpack.c.h.b16 %v726
  %v823 = vpack.c.b16 %v759, %v759
  %v824 = vpack.c.b16 %v760, %v760
  %v825 = vpack.c.b16 %v761, %v761
  %v826 = vpack.c.b16 %v762, %v762
  %v827 = vpack.c.b16 %v763, %v763
  %v828 = vpack.c.b16 %v764, %v764
  %v829 = vpack.c.b16 %v765, %v765
  %v830 = vpack.c.b16 %v766, %v766
  %v831 = vpack.c.b16 %v767, %v767
  %v832 = vpack.c.b16 %v768, %v768
  %v833 = vpack.c.b16 %v769, %v769
  %v834 = vpack.c.b16 %v770, %v770
  %v835 = vpack.c.b16 %v771, %v771
  %v836 = vpack.c.b16 %v772, %v772
  %v837 = vpack.c.b16 %v773, %v773
  %v838 = vpack.c.b16 %v774, %v774
  %v839 = vpack.c.b16 %v775, %v775
  %v840 = vpack.c.b16 %v776, %v776
  %v841 = vpack.c.b16 %v777, %v777
  %v842 = vpack.c.b16 %v778, %v778
  %v843 = vpack.c.b16 %v779, %v779
  %v844 = vpack.c.b16 %v780, %v780
  %v845 = vpack.c.b16 %v781, %v781
  %v846 = vpack.c.b16 %v782, %v782
  %v847 = vpack.c.b16 %v783, %v783
  %v848 = vpack.c.b16 %v784, %v784
  %v849 = vpack.c.b16 %v785, %v785
  %v850 = vpack.c.b16 %v786, %v786
  %v851 = vpack.c.b16 %v787, %v787
  %v852 = vpack.c.b16 %v788, %v788
  %v853 = vpack.c.b16 %v789, %v789
  %v854 = vpack.c.b16 %v790, %v790
  %v855 = vpack.c.b16 %v791, %v791
  %v856 = vpack.c.b16 %v792, %v792
  %v857 = vpack.c.b16 %v793, %v793
  %v858 = vpack.c.b16 %v794, %v794
  %v859 = vpack.c.b16 %v795, %v795
  %v860 = vpack.c.b16 %v796, %v796
  %v861 = vpack.c.b16 %v797, %v797
  %v862 = vpack.c.b16 %v798, %v798
  %v863 = vpack.c.b16 %v799, %v799
  %v864 = vpack.c.b16 %v800, %v800
  %v865 = vpack.c.b16 %v801, %v801
  %v866 = vpack.c.b16 %v802, %v802
  %v867 = vpack.c.b16 %v803, %v803
  %v868 = vpack.c.b16 %v804, %v804
  %v869 = vpack.c.b16 %v805, %v805
  %v870 = vpack.c.b16 %v806, %v806
  %v871 = vpack.c.b16 %v807, %v807
  %v872 = vpack.c.b16 %v808, %v808
  %v873 = vpack.c.b16 %v809, %v809
  %v874 = vpack.c.b16 %v810, %v810
  %v875 = vpack.c.b16 %v811, %v811
  %v876 = vpack.c.b16 %v812, %v812
  %v877 = vpack.c.b16 %v813, %v813
  %v878 = vpack.c.b16 %v814, %v814
  %v879 = vpack.c.b16 %v815, %v815
  %v880 = vpack.c.b16 %v816, %v816
  %v881 = vpack.c.b16 %v817, %v817
  %v882 = vpack.c.b16 %v818, %v818
  %v883 = vpack.c.b16 %v819, %v819
  %v884 = vpack.c.b16 %v820, %v820
  %v885 = vpack.c.b16 %v821, %v821
  %v886 = vpack.c.b16 %v822, %v822
  %951 = vst [vmem:[%s3] sm:$0xf] %v823
  %952 = vst [vmem:[%s3 + $0x4] sm:$0xf] %v824
  %953 = vst [vmem:[%s3 + $0x8] sm:$0xf] %v825
  %954 = vst [vmem:[%s3 + $0xc] sm:$0xf] %v826
  %955 = vst [vmem:[%s3 + $0x10] sm:$0xf] %v827
  %956 = vst [vmem:[%s3 + $0x14] sm:$0xf] %v828
  %957 = vst [vmem:[%s3 + $0x18] sm:$0xf] %v829
  %958 = vst [vmem:[%s3 + $0x1c] sm:$0xf] %v830
  %959 = vst [vmem:[%s3 + $0x20] sm:$0xf] %v831
  %960 = vst [vmem:[%s3 + $0x24] sm:$0xf] %v832
  %961 = vst [vmem:[%s3 + $0x28] sm:$0xf] %v833
  %962 = vst [vmem:[%s3 + $0x2c] sm:$0xf] %v834
  %963 = vst [vmem:[%s3 + $0x30] sm:$0xf] %v835
  %964 = vst [vmem:[%s3 + $0x34] sm:$0xf] %v836
  %965 = vst [vmem:[%s3 + $0x38] sm:$0xf] %v837
  %966 = vst [vmem:[%s3 + $0x3c] sm:$0xf] %v838
  %967 = vst [vmem:[%s3 + $0x40] sm:$0xf] %v839
  %968 = vst [vmem:[%s3 + $0x44] sm:$0xf] %v840
  %969 = vst [vmem:[%s3 + $0x48] sm:$0xf] %v841
  %970 = vst [vmem:[%s3 + $0x4c] sm:$0xf] %v842
  %971 = vst [vmem:[%s3 + $0x50] sm:$0xf] %v843
  %972 = vst [vmem:[%s3 + $0x54] sm:$0xf] %v844
  %973 = vst [vmem:[%s3 + $0x58] sm:$0xf] %v845
  %974 = vst [vmem:[%s3 + $0x5c] sm:$0xf] %v846
  %975 = vst [vmem:[%s3 + $0x60] sm:$0xf] %v847
  %976 = vst [vmem:[%s3 + $0x64] sm:$0xf] %v848
  %977 = vst [vmem:[%s3 + $0x68] sm:$0xf] %v849
  %978 = vst [vmem:[%s3 + $0x6c] sm:$0xf] %v850
  %979 = vst [vmem:[%s3 + $0x70] sm:$0xf] %v851
  %980 = vst [vmem:[%s3 + $0x74] sm:$0xf] %v852
  %981 = vst [vmem:[%s3 + $0x78] sm:$0xf] %v853
  %982 = vst [vmem:[%s3 + $0x7c] sm:$0xf] %v854
  %983 = vst [vmem:[%s3 + $0x80] sm:$0xf] %v855
  %984 = vst [vmem:[%s3 + $0x84] sm:$0xf] %v856
  %985 = vst [vmem:[%s3 + $0x88] sm:$0xf] %v857
  %986 = vst [vmem:[%s3 + $0x8c] sm:$0xf] %v858
  %987 = vst [vmem:[%s3 + $0x90] sm:$0xf] %v859
  %988 = vst [vmem:[%s3 + $0x94] sm:$0xf] %v860
  %989 = vst [vmem:[%s3 + $0x98] sm:$0xf] %v861
  %990 = vst [vmem:[%s3 + $0x9c] sm:$0xf] %v862
  %991 = vst [vmem:[%s3 + $0xa0] sm:$0xf] %v863
  %992 = vst [vmem:[%s3 + $0xa4] sm:$0xf] %v864
  %993 = vst [vmem:[%s3 + $0xa8] sm:$0xf] %v865
  %994 = vst [vmem:[%s3 + $0xac] sm:$0xf] %v866
  %995 = vst [vmem:[%s3 + $0xb0] sm:$0xf] %v867
  %996 = vst [vmem:[%s3 + $0xb4] sm:$0xf] %v868
  %997 = vst [vmem:[%s3 + $0xb8] sm:$0xf] %v869
  %998 = vst [vmem:[%s3 + $0xbc] sm:$0xf] %v870
  %999 = vst [vmem:[%s3 + $0xc0] sm:$0xf] %v871
  %1000 = vst [vmem:[%s3 + $0xc4] sm:$0xf] %v872
  %1001 = vst [vmem:[%s3 + $0xc8] sm:$0xf] %v873
  %1002 = vst [vmem:[%s3 + $0xcc] sm:$0xf] %v874
  %1003 = vst [vmem:[%s3 + $0xd0] sm:$0xf] %v875
  %1004 = vst [vmem:[%s3 + $0xd4] sm:$0xf] %v876
  %1005 = vst [vmem:[%s3 + $0xd8] sm:$0xf] %v877
  %1006 = vst [vmem:[%s3 + $0xdc] sm:$0xf] %v878
  %1007 = vst [vmem:[%s3 + $0xe0] sm:$0xf] %v879
  %1008 = vst [vmem:[%s3 + $0xe4] sm:$0xf] %v880
  %1009 = vst [vmem:[%s3 + $0xe8] sm:$0xf] %v881
  %1010 = vst [vmem:[%s3 + $0xec] sm:$0xf] %v882
  %1011 = vst [vmem:[%s3 + $0xf0] sm:$0xf] %v883
  %1012 = vst [vmem:[%s3 + $0xf4] sm:$0xf] %v884
  %1013 = vst [vmem:[%s3 + $0xf8] sm:$0xf] %v885
  %1014 = vst [vmem:[%s3 + $0xfc] sm:$0xf] %v886
  // Predicated region
  $region14: #{bottleneck_forward.4} parent=0 // pred_check
    _
  $region15: #{bottleneck_forward.4} parent=0 // pred_check_branch
    %1016 = sbr.rel (0) target = $region17
  $region16: #{bottleneck_forward.4} parent=0 // pred_region
    _
  $region17: #{bottleneck_forward.4} parent=0 // pred_fallthru
    _
  // Predicated region
  $region18: #{bottleneck_forward.4} parent=0 // pred_check
    _
  $region19: #{bottleneck_forward.4} parent=0 // pred_check_branch
    %1018 = sbr.rel (0) target = $region21
  $region20: #{bottleneck_forward.4} parent=0 // pred_region
    _
  $region21: #{bottleneck_forward.4} parent=0 // pred_fallthru
    _

// kernel: bottleneck_forward.5
$region0: #{bottleneck_forward.5}
  #allocation0 [shape = 'u32[]', space=smem, size = 0x4, offset = 0x4, fixed_abs, tag = 'smem constant byte address 0x4 - core index']
  #allocation1 [shape = 'u32[144,128]{1,0:T(1,128)}', space=vmem, size = 0x12000, scoped, tag = 'internal scratch']
  %s0 = inlined_call_operand.vmem [shape: bf16[128,72], index: 0, kind: input, shape index: {}]
  %s1 = inlined_call_operand.vmem [shape: bf16[72,128], index: 1, kind: input, shape index: {}]
  %s2 = inlined_call_operand.vmem [shape: f32[1,128], index: 2, kind: input, shape index: {}]
  %s3 = inlined_call_operand.vmem [shape: bf16[128,128], index: 3, kind: output, shape index: {}]
  %s4 = sld [smem:[#allocation0]]
  $region22: #{bottleneck_forward.5} parent=0
    _
  %s6 = ssub.s32 1, %s4
  %s7 = scalar_select 0, %s6, %s4
  // Predicated region
  $region2: #{bottleneck_forward.5} parent=0 // pred_check
    _
  $region3: #{bottleneck_forward.5} parent=0 // pred_check_branch
    %9 = sbr.rel (0) target = $region5
  $region4: #{bottleneck_forward.5} parent=0 // pred_region
    _
  $region5: #{bottleneck_forward.5} parent=0 // pred_fallthru
    _
  // Predicated region
  $region6: #{bottleneck_forward.5} parent=0 // pred_check
    _
  $region7: #{bottleneck_forward.5} parent=0 // pred_check_branch
    %11 = sbr.rel (0) target = $region9
  $region8: #{bottleneck_forward.5} parent=0 // pred_region
    _
  $region9: #{bottleneck_forward.5} parent=0 // pred_fallthru
    _
  // Predicated region
  $region10: #{bottleneck_forward.5} parent=0 // pred_check
    _
  $region11: #{bottleneck_forward.5} parent=0 // pred_check_branch
    %13 = sbr.rel (0) target = $region13
  $region12: #{bottleneck_forward.5} parent=0 // pred_region
    _
  $region13: #{bottleneck_forward.5} parent=0 // pred_fallthru
    _
  %v15 = vld [vmem:[%s0] sm:$0xf]
  %v16 = vld [vmem:[%s0 + $0x4] sm:$0xf]
  %v17 = vld [vmem:[%s0 + $0x8] sm:$0xf]
  %v18 = vld [vmem:[%s0 + $0xc] sm:$0xf]
  %v19 = vld [vmem:[%s0 + $0x10] sm:$0xf]
  %v20 = vld [vmem:[%s0 + $0x14] sm:$0xf]
  %v21 = vld [vmem:[%s0 + $0x18] sm:$0xf]
  %v22 = vld [vmem:[%s0 + $0x1c] sm:$0xf]
  %v23 = vld [vmem:[%s0 + $0x20] sm:$0xf]
  %v24 = vld [vmem:[%s0 + $0x24] sm:$0xf]
  %v25 = vld [vmem:[%s0 + $0x28] sm:$0xf]
  %v26 = vld [vmem:[%s0 + $0x2c] sm:$0xf]
  %v27 = vld [vmem:[%s0 + $0x30] sm:$0xf]
  %v28 = vld [vmem:[%s0 + $0x34] sm:$0xf]
  %v29 = vld [vmem:[%s0 + $0x38] sm:$0xf]
  %v30 = vld [vmem:[%s0 + $0x3c] sm:$0xf]
  %v31 = vld [vmem:[%s1] sm:$0xf]
  %v32 = vld [vmem:[%s1 + $0x4] sm:$0xf]
  %v33 = vld [vmem:[%s1 + $0x8] sm:$0xf]
  %v34 = vld [vmem:[%s1 + $0xc] sm:$0xf]
  %v35 = vld [vmem:[%s1 + $0x10] sm:$0xf]
  %v36 = vld [vmem:[%s1 + $0x14] sm:$0xf]
  %v37 = vld [vmem:[%s1 + $0x18] sm:$0xf]
  %v38 = vld [vmem:[%s1 + $0x1c] sm:$0xf]
  %v39 = vld [vmem:[%s1 + $0x20] sm:$0xf]
  %v40 = vld [vmem:[%s2] sm:$0x1]
  %v42 = vlaneseq
  %v43 = vshrl.u32 %v42, 7
  %v44 = vsub.s32 0, %v43
  %v45 = vrot.slane %v40, %v44
  %v63 = vunpack.c.l.b16 %v15
  %v64 = vunpack.c.l.b16 %v16
  %v65 = vunpack.c.l.b16 %v17
  %v66 = vunpack.c.l.b16 %v18
  %v67 = vunpack.c.l.b16 %v19
  %v68 = vunpack.c.l.b16 %v20
  %v69 = vunpack.c.l.b16 %v21
  %v70 = vunpack.c.l.b16 %v22
  %v71 = vunpack.c.l.b16 %v23
  %v72 = vunpack.c.l.b16 %v24
  %v73 = vunpack.c.l.b16 %v25
  %v74 = vunpack.c.l.b16 %v26
  %v75 = vunpack.c.l.b16 %v27
  %v76 = vunpack.c.l.b16 %v28
  %v77 = vunpack.c.l.b16 %v29
  %v78 = vunpack.c.l.b16 %v30
  %v79 = vpack.c.b16 %v64, %v63
  %v80 = vpack.c.b16 %v66, %v65
  %v81 = vpack.c.b16 %v68, %v67
  %v82 = vpack.c.b16 %v70, %v69
  %v83 = vpack.c.b16 %v72, %v71
  %v84 = vpack.c.b16 %v74, %v73
  %v85 = vpack.c.b16 %v76, %v75
  %v86 = vpack.c.b16 %v78, %v77
  %v96 = vunpack.c.l.b16 %v31
  %v97 = vunpack.c.l.b16 %v32
  %v98 = vunpack.c.l.b16 %v33
  %v99 = vunpack.c.l.b16 %v34
  %v100 = vunpack.c.l.b16 %v35
  %v101 = vunpack.c.l.b16 %v36
  %v102 = vunpack.c.l.b16 %v37
  %v103 = vunpack.c.l.b16 %v38
  %v104 = vunpack.c.l.b16 %v39
  %v105 = vpack.c.b16 %v97, %v96
  %v106 = vpack.c.b16 %v99, %v98
  %v107 = vpack.c.b16 %v101, %v100
  %v108 = vpack.c.b16 %v103, %v102
  %v109 = vpack.c.b16 %v104, %v104
  %vm114 = vcmask 588800
  %v116 = vsel %vm114, %v79, 0
  %v119 = vsel %vm114, %v80, 0
  %v122 = vsel %vm114, %v81, 0
  %v125 = vsel %vm114, %v82, 0
  %v128 = vsel %vm114, %v83, 0
  %v131 = vsel %vm114, %v84, 0
  %v134 = vsel %vm114, %v85, 0
  %v137 = vsel %vm114, %v86, 0
  %vm139 = vcmask 1043456
  %v141 = vsel %vm139, %v109, 0
  %143 = vmatprep.subr.bf16.mxu0 0
  %144 = vmatpush1.bf16.msra.mxu0 0
  %145 = vmatprep.subr.bf16.mxu0 0
  %146 = vmatpush1.bf16.msra.mxu0 0
  %147 = vmatprep.subr.bf16.mxu0 0
  %148 = vmatpush1.bf16.msra.mxu0 0
  %149 = vmatprep.subr.bf16.mxu0 0
  %150 = vmatpush1.bf16.msra.mxu0 %v141
  %151 = vmatprep.subr.bf16.mxu0 0
  %152 = vmatpush1.bf16.msra.mxu0 %v108
  %153 = vmatprep.subr.bf16.mxu0 0
  %154 = vmatpush1.bf16.msra.mxu0 %v107
  %155 = vmatprep.subr.bf16.mxu0 0
  %156 = vmatpush1.bf16.msra.mxu0 %v106
  %157 = vmatprep.subr.bf16.mxu0 0
  %158 = vmatpush1.bf16.msra.mxu0 %v105
  %159 = vmatprep.subr.bf16.mxu0 0
  %160 = vmatpush2.bf16.msra.mxu0 0
  %161 = vmatprep.subr.bf16.mxu0 0
  %162 = vmatpush2.bf16.msra.mxu0 0
  %163 = vmatprep.subr.bf16.mxu0 0
  %164 = vmatpush2.bf16.msra.mxu0 0
  %165 = vmatprep.subr.bf16.mxu0 0
  %166 = vmatpush2.bf16.msra.mxu0 0
  %167 = vmatprep.subr.bf16.mxu0 0
  %168 = vmatpush2.bf16.msra.mxu0 0
  %169 = vmatprep.subr.bf16.mxu0 0
  %170 = vmatpush2.bf16.msra.mxu0 0
  %171 = vmatprep.subr.bf16.mxu0 0
  %172 = vmatpush2.bf16.msra.mxu0 0
  %173 = vmatprep.subr.bf16.mxu0 0
  %174 = vmatpush2.bf16.msra.mxu0 0
  %175 = vmatprep.mubr.bf16.mxu0 0
  %176 = vmatmul.mubr.bf16.gmra.mxu0 %v116
  %v177 = vpop.f32.mrf.mxu0
  %v178 = vadd.f32 %v45, %v177
  %v179 = vpop.f32.mrf.mxu0
  %v180 = vpop.f32.mrf.mxu0
  %v181 = vadd.f32 %v45, %v180
  %v182 = vpop.f32.mrf.mxu0
  %183 = vmatprep.mubr.bf16.mxu0 0
  %184 = vmatmul.mubr.bf16.gmra.mxu0 %v119
  %v185 = vpop.f32.mrf.mxu0
  %v186 = vadd.f32 %v45, %v185
  %v187 = vpop.f32.mrf.mxu0
  %v188 = vpop.f32.mrf.mxu0
  %v189 = vadd.f32 %v45, %v188
  %v190 = vpop.f32.mrf.mxu0
  %191 = vmatprep.mubr.bf16.mxu0 0
  %192 = vmatmul.mubr.bf16.gmra.mxu0 %v122
  %v193 = vpop.f32.mrf.mxu0
  %v194 = vadd.f32 %v45, %v193
  %v195 = vpop.f32.mrf.mxu0
  %v196 = vpop.f32.mrf.mxu0
  %v197 = vadd.f32 %v45, %v196
  %v198 = vpop.f32.mrf.mxu0
  %199 = vmatprep.mubr.bf16.mxu0 0
  %200 = vmatmul.mubr.bf16.gmra.mxu0 %v125
  %v201 = vpop.f32.mrf.mxu0
  %v202 = vadd.f32 %v45, %v201
  %v203 = vpop.f32.mrf.mxu0
  %v204 = vpop.f32.mrf.mxu0
  %v205 = vadd.f32 %v45, %v204
  %v206 = vpop.f32.mrf.mxu0
  %207 = vmatprep.mubr.bf16.mxu0 0
  %208 = vmatmul.mubr.bf16.gmra.mxu0 %v128
  %v209 = vpop.f32.mrf.mxu0
  %v210 = vadd.f32 %v45, %v209
  %v211 = vpop.f32.mrf.mxu0
  %v212 = vpop.f32.mrf.mxu0
  %v213 = vadd.f32 %v45, %v212
  %v214 = vpop.f32.mrf.mxu0
  %215 = vmatprep.mubr.bf16.mxu0 0
  %216 = vmatmul.mubr.bf16.gmra.mxu0 %v131
  %v217 = vpop.f32.mrf.mxu0
  %v218 = vadd.f32 %v45, %v217
  %v219 = vpop.f32.mrf.mxu0
  %v220 = vpop.f32.mrf.mxu0
  %v221 = vadd.f32 %v45, %v220
  %v222 = vpop.f32.mrf.mxu0
  %223 = vmatprep.mubr.bf16.mxu0 0
  %224 = vmatmul.mubr.bf16.gmra.mxu0 %v134
  %v225 = vpop.f32.mrf.mxu0
  %v226 = vadd.f32 %v45, %v225
  %v227 = vpop.f32.mrf.mxu0
  %v228 = vpop.f32.mrf.mxu0
  %v229 = vadd.f32 %v45, %v228
  %v230 = vpop.f32.mrf.mxu0
  %231 = vmatprep.mubr.bf16.mxu0 0
  %232 = vmatmul.mubr.bf16.gmra.mxu0 %v137
  %v233 = vpop.f32.mrf.mxu0
  %v234 = vadd.f32 %v45, %v233
  %v235 = vpop.f32.mrf.mxu0
  %v236 = vpop.f32.mrf.mxu0
  %v237 = vadd.f32 %v45, %v236
  %v238 = vpop.f32.mrf.mxu0
  %239 = vdwg.mxu0
  %v240 = vmax.f32 %v178, 0.0
  %v241 = vmax.f32 %v181, 0.0
  %v242 = vmax.f32 %v186, 0.0
  %v243 = vmax.f32 %v189, 0.0
  %v244 = vmax.f32 %v194, 0.0
  %v245 = vmax.f32 %v197, 0.0
  %v246 = vmax.f32 %v202, 0.0
  %v247 = vmax.f32 %v205, 0.0
  %v248 = vmax.f32 %v210, 0.0
  %v249 = vmax.f32 %v213, 0.0
  %v250 = vmax.f32 %v218, 0.0
  %v251 = vmax.f32 %v221, 0.0
  %v252 = vmax.f32 %v226, 0.0
  %v253 = vmax.f32 %v229, 0.0
  %v254 = vmax.f32 %v234, 0.0
  %v255 = vmax.f32 %v237, 0.0
  %v256 = vpack.c.bf16 %v241, %v240
  %v257 = vpack.c.bf16 %v243, %v242
  %v258 = vpack.c.bf16 %v245, %v244
  %v259 = vpack.c.bf16 %v247, %v246
  %v260 = vpack.c.bf16 %v249, %v248
  %v261 = vpack.c.bf16 %v251, %v250
  %v262 = vpack.c.bf16 %v253, %v252
  %v263 = vpack.c.bf16 %v255, %v254
  %v272 = vunpack.c.l.b16 %v256
  %v273 = vunpack.c.h.b16 %v256
  %v274 = vunpack.c.l.b16 %v257
  %v275 = vunpack.c.h.b16 %v257
  %v276 = vunpack.c.l.b16 %v258
  %v277 = vunpack.c.h.b16 %v258
  %v278 = vunpack.c.l.b16 %v259
  %v279 = vunpack.c.h.b16 %v259
  %v280 = vunpack.c.l.b16 %v260
  %v281 = vunpack.c.h.b16 %v260
  %v282 = vunpack.c.l.b16 %v261
  %v283 = vunpack.c.h.b16 %v261
  %v284 = vunpack.c.l.b16 %v262
  %v285 = vunpack.c.h.b16 %v262
  %v286 = vunpack.c.l.b16 %v263
  %v287 = vunpack.c.h.b16 %v263
  %v288 = vpack.c.b16 %v272, %v272
  %v289 = vpack.c.b16 %v273, %v273
  %v290 = vpack.c.b16 %v274, %v274
  %v291 = vpack.c.b16 %v275, %v275
  %v292 = vpack.c.b16 %v276, %v276
  %v293 = vpack.c.b16 %v277, %v277
  %v294 = vpack.c.b16 %v278, %v278
  %v295 = vpack.c.b16 %v279, %v279
  %v296 = vpack.c.b16 %v280, %v280
  %v297 = vpack.c.b16 %v281, %v281
  %v298 = vpack.c.b16 %v282, %v282
  %v299 = vpack.c.b16 %v283, %v283
  %v300 = vpack.c.b16 %v284, %v284
  %v301 = vpack.c.b16 %v285, %v285
  %v302 = vpack.c.b16 %v286, %v286
  %v303 = vpack.c.b16 %v287, %v287
  %320 = vst [vmem:[%s3] sm:$0xf] %v288
  %321 = vst [vmem:[%s3 + $0x4] sm:$0xf] %v289
  %322 = vst [vmem:[%s3 + $0x8] sm:$0xf] %v290
  %323 = vst [vmem:[%s3 + $0xc] sm:$0xf] %v291
  %324 = vst [vmem:[%s3 + $0x10] sm:$0xf] %v292
  %325 = vst [vmem:[%s3 + $0x14] sm:$0xf] %v293
  %326 = vst [vmem:[%s3 + $0x18] sm:$0xf] %v294
  %327 = vst [vmem:[%s3 + $0x1c] sm:$0xf] %v295
  %328 = vst [vmem:[%s3 + $0x20] sm:$0xf] %v296
  %329 = vst [vmem:[%s3 + $0x24] sm:$0xf] %v297
  %330 = vst [vmem:[%s3 + $0x28] sm:$0xf] %v298
  %331 = vst [vmem:[%s3 + $0x2c] sm:$0xf] %v299
  %332 = vst [vmem:[%s3 + $0x30] sm:$0xf] %v300
  %333 = vst [vmem:[%s3 + $0x34] sm:$0xf] %v301
  %334 = vst [vmem:[%s3 + $0x38] sm:$0xf] %v302
  %335 = vst [vmem:[%s3 + $0x3c] sm:$0xf] %v303
  // Predicated region
  $region14: #{bottleneck_forward.5} parent=0 // pred_check
    _
  $region15: #{bottleneck_forward.5} parent=0 // pred_check_branch
    %337 = sbr.rel (0) target = $region17
  $region16: #{bottleneck_forward.5} parent=0 // pred_region
    _
  $region17: #{bottleneck_forward.5} parent=0 // pred_fallthru
    _
  // Predicated region
  $region18: #{bottleneck_forward.5} parent=0 // pred_check
    _
  $region19: #{bottleneck_forward.5} parent=0 // pred_check_branch
    %339 = sbr.rel (0) target = $region21
  $region20: #{bottleneck_forward.5} parent=0 // pred_region
    _
  $region21: #{bottleneck_forward.5} parent=0 // pred_fallthru
    _

// kernel: bottleneck_forward.6
$region0: #{bottleneck_forward.6}
  #allocation0 [shape = 'u32[]', space=smem, size = 0x4, offset = 0x4, fixed_abs, tag = 'smem constant byte address 0x4 - core index']
  #allocation1 [shape = 'u32[144,128]{1,0:T(1,128)}', space=vmem, size = 0x12000, scoped, tag = 'internal scratch']
  %s0 = inlined_call_operand.vmem [shape: bf16[128,128], index: 0, kind: input, shape index: {}]
  %s1 = inlined_call_operand.vmem [shape: bf16[128,128], index: 1, kind: input, shape index: {}]
  %s2 = inlined_call_operand.vmem [shape: f32[1,128], index: 2, kind: input, shape index: {}]
  %s3 = inlined_call_operand.vmem [shape: bf16[128,128], index: 3, kind: output, shape index: {}]
  %s4 = sld [smem:[#allocation0]]
  $region22: #{bottleneck_forward.6} parent=0
    _
  %s6 = ssub.s32 1, %s4
  %s7 = scalar_select 0, %s6, %s4
  // Predicated region
  $region2: #{bottleneck_forward.6} parent=0 // pred_check
    _
  $region3: #{bottleneck_forward.6} parent=0 // pred_check_branch
    %9 = sbr.rel (0) target = $region5
  $region4: #{bottleneck_forward.6} parent=0 // pred_region
    _
  $region5: #{bottleneck_forward.6} parent=0 // pred_fallthru
    _
  // Predicated region
  $region6: #{bottleneck_forward.6} parent=0 // pred_check
    _
  $region7: #{bottleneck_forward.6} parent=0 // pred_check_branch
    %11 = sbr.rel (0) target = $region9
  $region8: #{bottleneck_forward.6} parent=0 // pred_region
    _
  $region9: #{bottleneck_forward.6} parent=0 // pred_fallthru
    _
  // Predicated region
  $region10: #{bottleneck_forward.6} parent=0 // pred_check
    _
  $region11: #{bottleneck_forward.6} parent=0 // pred_check_branch
    %13 = sbr.rel (0) target = $region13
  $region12: #{bottleneck_forward.6} parent=0 // pred_region
    _
  $region13: #{bottleneck_forward.6} parent=0 // pred_fallthru
    _
  %v15 = vld [vmem:[%s0] sm:$0xf]
  %v16 = vld [vmem:[%s0 + $0x4] sm:$0xf]
  %v17 = vld [vmem:[%s0 + $0x8] sm:$0xf]
  %v18 = vld [vmem:[%s0 + $0xc] sm:$0xf]
  %v19 = vld [vmem:[%s0 + $0x10] sm:$0xf]
  %v20 = vld [vmem:[%s0 + $0x14] sm:$0xf]
  %v21 = vld [vmem:[%s0 + $0x18] sm:$0xf]
  %v22 = vld [vmem:[%s0 + $0x1c] sm:$0xf]
  %v23 = vld [vmem:[%s0 + $0x20] sm:$0xf]
  %v24 = vld [vmem:[%s0 + $0x24] sm:$0xf]
  %v25 = vld [vmem:[%s0 + $0x28] sm:$0xf]
  %v26 = vld [vmem:[%s0 + $0x2c] sm:$0xf]
  %v27 = vld [vmem:[%s0 + $0x30] sm:$0xf]
  %v28 = vld [vmem:[%s0 + $0x34] sm:$0xf]
  %v29 = vld [vmem:[%s0 + $0x38] sm:$0xf]
  %v30 = vld [vmem:[%s0 + $0x3c] sm:$0xf]
  %v31 = vld [vmem:[%s1] sm:$0xf]
  %v32 = vld [vmem:[%s1 + $0x4] sm:$0xf]
  %v33 = vld [vmem:[%s1 + $0x8] sm:$0xf]
  %v34 = vld [vmem:[%s1 + $0xc] sm:$0xf]
  %v35 = vld [vmem:[%s1 + $0x10] sm:$0xf]
  %v36 = vld [vmem:[%s1 + $0x14] sm:$0xf]
  %v37 = vld [vmem:[%s1 + $0x18] sm:$0xf]
  %v38 = vld [vmem:[%s1 + $0x1c] sm:$0xf]
  %v39 = vld [vmem:[%s1 + $0x20] sm:$0xf]
  %v40 = vld [vmem:[%s1 + $0x24] sm:$0xf]
  %v41 = vld [vmem:[%s1 + $0x28] sm:$0xf]
  %v42 = vld [vmem:[%s1 + $0x2c] sm:$0xf]
  %v43 = vld [vmem:[%s1 + $0x30] sm:$0xf]
  %v44 = vld [vmem:[%s1 + $0x34] sm:$0xf]
  %v45 = vld [vmem:[%s1 + $0x38] sm:$0xf]
  %v46 = vld [vmem:[%s1 + $0x3c] sm:$0xf]
  %v47 = vld [vmem:[%s2] sm:$0x1]
  %v49 = vlaneseq
  %v50 = vshrl.u32 %v49, 7
  %v51 = vsub.s32 0, %v50
  %v52 = vrot.slane %v47, %v51
  %v70 = vunpack.c.l.b16 %v15
  %v71 = vunpack.c.l.b16 %v16
  %v72 = vunpack.c.l.b16 %v17
  %v73 = vunpack.c.l.b16 %v18
  %v74 = vunpack.c.l.b16 %v19
  %v75 = vunpack.c.l.b16 %v20
  %v76 = vunpack.c.l.b16 %v21
  %v77 = vunpack.c.l.b16 %v22
  %v78 = vunpack.c.l.b16 %v23
  %v79 = vunpack.c.l.b16 %v24
  %v80 = vunpack.c.l.b16 %v25
  %v81 = vunpack.c.l.b16 %v26
  %v82 = vunpack.c.l.b16 %v27
  %v83 = vunpack.c.l.b16 %v28
  %v84 = vunpack.c.l.b16 %v29
  %v85 = vunpack.c.l.b16 %v30
  %v86 = vpack.c.b16 %v71, %v70
  %v87 = vpack.c.b16 %v73, %v72
  %v88 = vpack.c.b16 %v75, %v74
  %v89 = vpack.c.b16 %v77, %v76
  %v90 = vpack.c.b16 %v79, %v78
  %v91 = vpack.c.b16 %v81, %v80
  %v92 = vpack.c.b16 %v83, %v82
  %v93 = vpack.c.b16 %v85, %v84
  %v118 = vunpack.c.l.b16 %v31
  %v119 = vunpack.c.l.b16 %v32
  %v120 = vunpack.c.l.b16 %v33
  %v121 = vunpack.c.l.b16 %v34
  %v122 = vunpack.c.l.b16 %v35
  %v123 = vunpack.c.l.b16 %v36
  %v124 = vunpack.c.l.b16 %v37
  %v125 = vunpack.c.l.b16 %v38
  %v126 = vunpack.c.l.b16 %v39
  %v127 = vunpack.c.l.b16 %v40
  %v128 = vunpack.c.l.b16 %v41
  %v129 = vunpack.c.l.b16 %v42
  %v130 = vunpack.c.l.b16 %v43
  %v131 = vunpack.c.l.b16 %v44
  %v132 = vunpack.c.l.b16 %v45
  %v133 = vunpack.c.l.b16 %v46
  %v134 = vpack.c.b16 %v119, %v118
  %v135 = vpack.c.b16 %v121, %v120
  %v136 = vpack.c.b16 %v123, %v122
  %v137 = vpack.c.b16 %v125, %v124
  %v138 = vpack.c.b16 %v127, %v126
  %v139 = vpack.c.b16 %v129, %v128
  %v140 = vpack.c.b16 %v131, %v130
  %v141 = vpack.c.b16 %v133, %v132
  %150 = vmatprep.subr.bf16.mxu0 0
  %151 = vmatpush1.bf16.msra.mxu0 %v141
  %152 = vmatprep.subr.bf16.mxu0 0
  %153 = vmatpush1.bf16.msra.mxu0 %v140
  %154 = vmatprep.subr.bf16.mxu0 0
  %155 = vmatpush1.bf16.msra.mxu0 %v139
  %156 = vmatprep.subr.bf16.mxu0 0
  %157 = vmatpush1.bf16.msra.mxu0 %v138
  %158 = vmatprep.subr.bf16.mxu0 0
  %159 = vmatpush1.bf16.msra.mxu0 %v137
  %160 = vmatprep.subr.bf16.mxu0 0
  %161 = vmatpush1.bf16.msra.mxu0 %v136
  %162 = vmatprep.subr.bf16.mxu0 0
  %163 = vmatpush1.bf16.msra.mxu0 %v135
  %164 = vmatprep.subr.bf16.mxu0 0
  %165 = vmatpush1.bf16.msra.mxu0 %v134
  %166 = vmatprep.subr.bf16.mxu0 0
  %167 = vmatpush2.bf16.msra.mxu0 0
  %168 = vmatprep.subr.bf16.mxu0 0
  %169 = vmatpush2.bf16.msra.mxu0 0
  %170 = vmatprep.subr.bf16.mxu0 0
  %171 = vmatpush2.bf16.msra.mxu0 0
  %172 = vmatprep.subr.bf16.mxu0 0
  %173 = vmatpush2.bf16.msra.mxu0 0
  %174 = vmatprep.subr.bf16.mxu0 0
  %175 = vmatpush2.bf16.msra.mxu0 0
  %176 = vmatprep.subr.bf16.mxu0 0
  %177 = vmatpush2.bf16.msra.mxu0 0
  %178 = vmatprep.subr.bf16.mxu0 0
  %179 = vmatpush2.bf16.msra.mxu0 0
  %180 = vmatprep.subr.bf16.mxu0 0
  %181 = vmatpush2.bf16.msra.mxu0 0
  %182 = vmatprep.mubr.bf16.mxu0 0
  %183 = vmatmul.mubr.bf16.gmra.mxu0 %v86
  %v184 = vpop.f32.mrf.mxu0
  %v185 = vadd.f32 %v52, %v184
  %v186 = vpop.f32.mrf.mxu0
  %v187 = vpop.f32.mrf.mxu0
  %v188 = vadd.f32 %v52, %v187
  %v189 = vpop.f32.mrf.mxu0
  %190 = vmatprep.mubr.bf16.mxu0 0
  %191 = vmatmul.mubr.bf16.gmra.mxu0 %v87
  %v192 = vpop.f32.mrf.mxu0
  %v193 = vadd.f32 %v52, %v192
  %v194 = vpop.f32.mrf.mxu0
  %v195 = vpop.f32.mrf.mxu0
  %v196 = vadd.f32 %v52, %v195
  %v197 = vpop.f32.mrf.mxu0
  %198 = vmatprep.mubr.bf16.mxu0 0
  %199 = vmatmul.mubr.bf16.gmra.mxu0 %v88
  %v200 = vpop.f32.mrf.mxu0
  %v201 = vadd.f32 %v52, %v200
  %v202 = vpop.f32.mrf.mxu0
  %v203 = vpop.f32.mrf.mxu0
  %v204 = vadd.f32 %v52, %v203
  %v205 = vpop.f32.mrf.mxu0
  %206 = vmatprep.mubr.bf16.mxu0 0
  %207 = vmatmul.mubr.bf16.gmra.mxu0 %v89
  %v208 = vpop.f32.mrf.mxu0
  %v209 = vadd.f32 %v52, %v208
  %v210 = vpop.f32.mrf.mxu0
  %v211 = vpop.f32.mrf.mxu0
  %v212 = vadd.f32 %v52, %v211
  %v213 = vpop.f32.mrf.mxu0
  %214 = vmatprep.mubr.bf16.mxu0 0
  %215 = vmatmul.mubr.bf16.gmra.mxu0 %v90
  %v216 = vpop.f32.mrf.mxu0
  %v217 = vadd.f32 %v52, %v216
  %v218 = vpop.f32.mrf.mxu0
  %v219 = vpop.f32.mrf.mxu0
  %v220 = vadd.f32 %v52, %v219
  %v221 = vpop.f32.mrf.mxu0
  %222 = vmatprep.mubr.bf16.mxu0 0
  %223 = vmatmul.mubr.bf16.gmra.mxu0 %v91
  %v224 = vpop.f32.mrf.mxu0
  %v225 = vadd.f32 %v52, %v224
  %v226 = vpop.f32.mrf.mxu0
  %v227 = vpop.f32.mrf.mxu0
  %v228 = vadd.f32 %v52, %v227
  %v229 = vpop.f32.mrf.mxu0
  %230 = vmatprep.mubr.bf16.mxu0 0
  %231 = vmatmul.mubr.bf16.gmra.mxu0 %v92
  %v232 = vpop.f32.mrf.mxu0
  %v233 = vadd.f32 %v52, %v232
  %v234 = vpop.f32.mrf.mxu0
  %v235 = vpop.f32.mrf.mxu0
  %v236 = vadd.f32 %v52, %v235
  %v237 = vpop.f32.mrf.mxu0
  %238 = vmatprep.mubr.bf16.mxu0 0
  %239 = vmatmul.mubr.bf16.gmra.mxu0 %v93
  %v240 = vpop.f32.mrf.mxu0
  %v241 = vadd.f32 %v52, %v240
  %v242 = vpop.f32.mrf.mxu0
  %v243 = vpop.f32.mrf.mxu0
  %v244 = vadd.f32 %v52, %v243
  %v245 = vpop.f32.mrf.mxu0
  %246 = vdwg.mxu0
  %v247 = vpack.c.bf16 %v188, %v185
  %v248 = vpack.c.bf16 %v196, %v193
  %v249 = vpack.c.bf16 %v204, %v201
  %v250 = vpack.c.bf16 %v212, %v209
  %v251 = vpack.c.bf16 %v220, %v217
  %v252 = vpack.c.bf16 %v228, %v225
  %v253 = vpack.c.bf16 %v236, %v233
  %v254 = vpack.c.bf16 %v244, %v241
  %v263 = vunpack.c.l.b16 %v247
  %v264 = vunpack.c.h.b16 %v247
  %v265 = vunpack.c.l.b16 %v248
  %v266 = vunpack.c.h.b16 %v248
  %v267 = vunpack.c.l.b16 %v249
  %v268 = vunpack.c.h.b16 %v249
  %v269 = vunpack.c.l.b16 %v250
  %v270 = vunpack.c.h.b16 %v250
  %v271 = vunpack.c.l.b16 %v251
  %v272 = vunpack.c.h.b16 %v251
  %v273 = vunpack.c.l.b16 %v252
  %v274 = vunpack.c.h.b16 %v252
  %v275 = vunpack.c.l.b16 %v253
  %v276 = vunpack.c.h.b16 %v253
  %v277 = vunpack.c.l.b16 %v254
  %v278 = vunpack.c.h.b16 %v254
  %v279 = vpack.c.b16 %v263, %v263
  %v280 = vpack.c.b16 %v264, %v264
  %v281 = vpack.c.b16 %v265, %v265
  %v282 = vpack.c.b16 %v266, %v266
  %v283 = vpack.c.b16 %v267, %v267
  %v284 = vpack.c.b16 %v268, %v268
  %v285 = vpack.c.b16 %v269, %v269
  %v286 = vpack.c.b16 %v270, %v270
  %v287 = vpack.c.b16 %v271, %v271
  %v288 = vpack.c.b16 %v272, %v272
  %v289 = vpack.c.b16 %v273, %v273
  %v290 = vpack.c.b16 %v274, %v274
  %v291 = vpack.c.b16 %v275, %v275
  %v292 = vpack.c.b16 %v276, %v276
  %v293 = vpack.c.b16 %v277, %v277
  %v294 = vpack.c.b16 %v278, %v278
  %311 = vst [vmem:[%s3] sm:$0xf] %v279
  %312 = vst [vmem:[%s3 + $0x4] sm:$0xf] %v280
  %313 = vst [vmem:[%s3 + $0x8] sm:$0xf] %v281
  %314 = vst [vmem:[%s3 + $0xc] sm:$0xf] %v282
  %315 = vst [vmem:[%s3 + $0x10] sm:$0xf] %v283
  %316 = vst [vmem:[%s3 + $0x14] sm:$0xf] %v284
  %317 = vst [vmem:[%s3 + $0x18] sm:$0xf] %v285
  %318 = vst [vmem:[%s3 + $0x1c] sm:$0xf] %v286
  %319 = vst [vmem:[%s3 + $0x20] sm:$0xf] %v287
  %320 = vst [vmem:[%s3 + $0x24] sm:$0xf] %v288
  %321 = vst [vmem:[%s3 + $0x28] sm:$0xf] %v289
  %322 = vst [vmem:[%s3 + $0x2c] sm:$0xf] %v290
  %323 = vst [vmem:[%s3 + $0x30] sm:$0xf] %v291
  %324 = vst [vmem:[%s3 + $0x34] sm:$0xf] %v292
  %325 = vst [vmem:[%s3 + $0x38] sm:$0xf] %v293
  %326 = vst [vmem:[%s3 + $0x3c] sm:$0xf] %v294
  // Predicated region
  $region14: #{bottleneck_forward.6} parent=0 // pred_check
    _
  $region15: #{bottleneck_forward.6} parent=0 // pred_check_branch
    %328 = sbr.rel (0) target = $region17
  $region16: #{bottleneck_forward.6} parent=0 // pred_region
    _
  $region17: #{bottleneck_forward.6} parent=0 // pred_fallthru
    _
  // Predicated region
  $region18: #{bottleneck_forward.6} parent=0 // pred_check
    _
  $region19: #{bottleneck_forward.6} parent=0 // pred_check_branch
    %330 = sbr.rel (0) target = $region21
  $region20: #{bottleneck_forward.6} parent=0 // pred_region
    _
  $region21: #{bottleneck_forward.6} parent=0 // pred_fallthru
    _

// kernel: bottleneck_forward.7
$region0: #{bottleneck_forward.7}
  #allocation0 [shape = 'u32[]', space=smem, size = 0x4, offset = 0x4, fixed_abs, tag = 'smem constant byte address 0x4 - core index']
  #allocation1 [shape = 'u32[144,128]{1,0:T(1,128)}', space=vmem, size = 0x12000, scoped, tag = 'internal scratch']
  %s0 = inlined_call_operand.vmem [shape: bf16[128,128], index: 0, kind: input, shape index: {}]
  %s1 = inlined_call_operand.vmem [shape: bf16[128,128], index: 1, kind: input, shape index: {}]
  %s2 = inlined_call_operand.vmem [shape: f32[1,128], index: 2, kind: input, shape index: {}]
  %s3 = inlined_call_operand.vmem [shape: bf16[128,128], index: 3, kind: input, shape index: {}]
  %s4 = inlined_call_operand.vmem [shape: f32[128,128], index: 4, kind: output, shape index: {}]
  %s5 = sld [smem:[#allocation0]]
  $region26: #{bottleneck_forward.7} parent=0
    _
  %s7 = ssub.s32 1, %s5
  %s8 = scalar_select 0, %s7, %s5
  // Predicated region
  $region2: #{bottleneck_forward.7} parent=0 // pred_check
    _
  $region3: #{bottleneck_forward.7} parent=0 // pred_check_branch
    %10 = sbr.rel (0) target = $region5
  $region4: #{bottleneck_forward.7} parent=0 // pred_region
    _
  $region5: #{bottleneck_forward.7} parent=0 // pred_fallthru
    _
  // Predicated region
  $region6: #{bottleneck_forward.7} parent=0 // pred_check
    _
  $region7: #{bottleneck_forward.7} parent=0 // pred_check_branch
    %12 = sbr.rel (0) target = $region9
  $region8: #{bottleneck_forward.7} parent=0 // pred_region
    _
  $region9: #{bottleneck_forward.7} parent=0 // pred_fallthru
    _
  // Predicated region
  $region10: #{bottleneck_forward.7} parent=0 // pred_check
    _
  $region11: #{bottleneck_forward.7} parent=0 // pred_check_branch
    %14 = sbr.rel (0) target = $region13
  $region12: #{bottleneck_forward.7} parent=0 // pred_region
    _
  $region13: #{bottleneck_forward.7} parent=0 // pred_fallthru
    _
  // Predicated region
  $region14: #{bottleneck_forward.7} parent=0 // pred_check
    _
  $region15: #{bottleneck_forward.7} parent=0 // pred_check_branch
    %16 = sbr.rel (0) target = $region17
  $region16: #{bottleneck_forward.7} parent=0 // pred_region
    _
  $region17: #{bottleneck_forward.7} parent=0 // pred_fallthru
    _
  %v18 = vld [vmem:[%s0] sm:$0xf]
  %v19 = vld [vmem:[%s0 + $0x4] sm:$0xf]
  %v20 = vld [vmem:[%s0 + $0x8] sm:$0xf]
  %v21 = vld [vmem:[%s0 + $0xc] sm:$0xf]
  %v22 = vld [vmem:[%s0 + $0x10] sm:$0xf]
  %v23 = vld [vmem:[%s0 + $0x14] sm:$0xf]
  %v24 = vld [vmem:[%s0 + $0x18] sm:$0xf]
  %v25 = vld [vmem:[%s0 + $0x1c] sm:$0xf]
  %v26 = vld [vmem:[%s0 + $0x20] sm:$0xf]
  %v27 = vld [vmem:[%s0 + $0x24] sm:$0xf]
  %v28 = vld [vmem:[%s0 + $0x28] sm:$0xf]
  %v29 = vld [vmem:[%s0 + $0x2c] sm:$0xf]
  %v30 = vld [vmem:[%s0 + $0x30] sm:$0xf]
  %v31 = vld [vmem:[%s0 + $0x34] sm:$0xf]
  %v32 = vld [vmem:[%s0 + $0x38] sm:$0xf]
  %v33 = vld [vmem:[%s0 + $0x3c] sm:$0xf]
  %v34 = vld [vmem:[%s1] sm:$0xf]
  %v35 = vld [vmem:[%s1 + $0x4] sm:$0xf]
  %v36 = vld [vmem:[%s1 + $0x8] sm:$0xf]
  %v37 = vld [vmem:[%s1 + $0xc] sm:$0xf]
  %v38 = vld [vmem:[%s1 + $0x10] sm:$0xf]
  %v39 = vld [vmem:[%s1 + $0x14] sm:$0xf]
  %v40 = vld [vmem:[%s1 + $0x18] sm:$0xf]
  %v41 = vld [vmem:[%s1 + $0x1c] sm:$0xf]
  %v42 = vld [vmem:[%s1 + $0x20] sm:$0xf]
  %v43 = vld [vmem:[%s1 + $0x24] sm:$0xf]
  %v44 = vld [vmem:[%s1 + $0x28] sm:$0xf]
  %v45 = vld [vmem:[%s1 + $0x2c] sm:$0xf]
  %v46 = vld [vmem:[%s1 + $0x30] sm:$0xf]
  %v47 = vld [vmem:[%s1 + $0x34] sm:$0xf]
  %v48 = vld [vmem:[%s1 + $0x38] sm:$0xf]
  %v49 = vld [vmem:[%s1 + $0x3c] sm:$0xf]
  %v50 = vld [vmem:[%s2] sm:$0x1]
  %v52 = vlaneseq
  %v53 = vshrl.u32 %v52, 7
  %v54 = vsub.s32 0, %v53
  %v55 = vrot.slane %v50, %v54
  %v73 = vunpack.c.l.b16 %v18
  %v74 = vunpack.c.l.b16 %v19
  %v75 = vunpack.c.l.b16 %v20
  %v76 = vunpack.c.l.b16 %v21
  %v77 = vunpack.c.l.b16 %v22
  %v78 = vunpack.c.l.b16 %v23
  %v79 = vunpack.c.l.b16 %v24
  %v80 = vunpack.c.l.b16 %v25
  %v81 = vunpack.c.l.b16 %v26
  %v82 = vunpack.c.l.b16 %v27
  %v83 = vunpack.c.l.b16 %v28
  %v84 = vunpack.c.l.b16 %v29
  %v85 = vunpack.c.l.b16 %v30
  %v86 = vunpack.c.l.b16 %v31
  %v87 = vunpack.c.l.b16 %v32
  %v88 = vunpack.c.l.b16 %v33
  %v89 = vpack.c.b16 %v74, %v73
  %v90 = vpack.c.b16 %v76, %v75
  %v91 = vpack.c.b16 %v78, %v77
  %v92 = vpack.c.b16 %v80, %v79
  %v93 = vpack.c.b16 %v82, %v81
  %v94 = vpack.c.b16 %v84, %v83
  %v95 = vpack.c.b16 %v86, %v85
  %v96 = vpack.c.b16 %v88, %v87
  %v121 = vunpack.c.l.b16 %v34
  %v122 = vunpack.c.l.b16 %v35
  %v123 = vunpack.c.l.b16 %v36
  %v124 = vunpack.c.l.b16 %v37
  %v125 = vunpack.c.l.b16 %v38
  %v126 = vunpack.c.l.b16 %v39
  %v127 = vunpack.c.l.b16 %v40
  %v128 = vunpack.c.l.b16 %v41
  %v129 = vunpack.c.l.b16 %v42
  %v130 = vunpack.c.l.b16 %v43
  %v131 = vunpack.c.l.b16 %v44
  %v132 = vunpack.c.l.b16 %v45
  %v133 = vunpack.c.l.b16 %v46
  %v134 = vunpack.c.l.b16 %v47
  %v135 = vunpack.c.l.b16 %v48
  %v136 = vunpack.c.l.b16 %v49
  %v137 = vpack.c.b16 %v122, %v121
  %v138 = vpack.c.b16 %v124, %v123
  %v139 = vpack.c.b16 %v126, %v125
  %v140 = vpack.c.b16 %v128, %v127
  %v141 = vpack.c.b16 %v130, %v129
  %v142 = vpack.c.b16 %v132, %v131
  %v143 = vpack.c.b16 %v134, %v133
  %v144 = vpack.c.b16 %v136, %v135
  %153 = vmatprep.subr.bf16.mxu0 0
  %154 = vmatpush1.bf16.msra.mxu0 %v144
  %155 = vmatprep.subr.bf16.mxu0 0
  %156 = vmatpush1.bf16.msra.mxu0 %v143
  %157 = vmatprep.subr.bf16.mxu0 0
  %158 = vmatpush1.bf16.msra.mxu0 %v142
  %159 = vmatprep.subr.bf16.mxu0 0
  %160 = vmatpush1.bf16.msra.mxu0 %v141
  %161 = vmatprep.subr.bf16.mxu0 0
  %162 = vmatpush1.bf16.msra.mxu0 %v140
  %163 = vmatprep.subr.bf16.mxu0 0
  %164 = vmatpush1.bf16.msra.mxu0 %v139
  %165 = vmatprep.subr.bf16.mxu0 0
  %166 = vmatpush1.bf16.msra.mxu0 %v138
  %167 = vmatprep.subr.bf16.mxu0 0
  %168 = vmatpush1.bf16.msra.mxu0 %v137
  %169 = vmatprep.subr.bf16.mxu0 0
  %170 = vmatpush2.bf16.msra.mxu0 0
  %171 = vmatprep.subr.bf16.mxu0 0
  %172 = vmatpush2.bf16.msra.mxu0 0
  %173 = vmatprep.subr.bf16.mxu0 0
  %174 = vmatpush2.bf16.msra.mxu0 0
  %175 = vmatprep.subr.bf16.mxu0 0
  %176 = vmatpush2.bf16.msra.mxu0 0
  %177 = vmatprep.subr.bf16.mxu0 0
  %178 = vmatpush2.bf16.msra.mxu0 0
  %179 = vmatprep.subr.bf16.mxu0 0
  %180 = vmatpush2.bf16.msra.mxu0 0
  %181 = vmatprep.subr.bf16.mxu0 0
  %182 = vmatpush2.bf16.msra.mxu0 0
  %183 = vmatprep.subr.bf16.mxu0 0
  %184 = vmatpush2.bf16.msra.mxu0 0
  %185 = vmatprep.mubr.bf16.mxu0 0
  %186 = vmatmul.mubr.bf16.gmra.mxu0 %v89
  %v187 = vpop.f32.mrf.mxu0
  %v188 = vadd.f32 %v55, %v187
  %v189 = vpop.f32.mrf.mxu0
  %v190 = vpop.f32.mrf.mxu0
  %v191 = vadd.f32 %v55, %v190
  %v192 = vpop.f32.mrf.mxu0
  %193 = vmatprep.mubr.bf16.mxu0 0
  %194 = vmatmul.mubr.bf16.gmra.mxu0 %v90
  %v195 = vpop.f32.mrf.mxu0
  %v196 = vadd.f32 %v55, %v195
  %v197 = vpop.f32.mrf.mxu0
  %v198 = vpop.f32.mrf.mxu0
  %v199 = vadd.f32 %v55, %v198
  %v200 = vpop.f32.mrf.mxu0
  %201 = vmatprep.mubr.bf16.mxu0 0
  %202 = vmatmul.mubr.bf16.gmra.mxu0 %v91
  %v203 = vpop.f32.mrf.mxu0
  %v204 = vadd.f32 %v55, %v203
  %v205 = vpop.f32.mrf.mxu0
  %v206 = vpop.f32.mrf.mxu0
  %v207 = vadd.f32 %v55, %v206
  %v208 = vpop.f32.mrf.mxu0
  %209 = vmatprep.mubr.bf16.mxu0 0
  %210 = vmatmul.mubr.bf16.gmra.mxu0 %v92
  %v211 = vpop.f32.mrf.mxu0
  %v212 = vadd.f32 %v55, %v211
  %v213 = vpop.f32.mrf.mxu0
  %v214 = vpop.f32.mrf.mxu0
  %v215 = vadd.f32 %v55, %v214
  %v216 = vpop.f32.mrf.mxu0
  %217 = vmatprep.mubr.bf16.mxu0 0
  %218 = vmatmul.mubr.bf16.gmra.mxu0 %v93
  %v219 = vpop.f32.mrf.mxu0
  %v220 = vadd.f32 %v55, %v219
  %v221 = vpop.f32.mrf.mxu0
  %v222 = vpop.f32.mrf.mxu0
  %v223 = vadd.f32 %v55, %v222
  %v224 = vpop.f32.mrf.mxu0
  %225 = vmatprep.mubr.bf16.mxu0 0
  %226 = vmatmul.mubr.bf16.gmra.mxu0 %v94
  %v227 = vpop.f32.mrf.mxu0
  %v228 = vadd.f32 %v55, %v227
  %v229 = vpop.f32.mrf.mxu0
  %v230 = vpop.f32.mrf.mxu0
  %v231 = vadd.f32 %v55, %v230
  %v232 = vpop.f32.mrf.mxu0
  %233 = vmatprep.mubr.bf16.mxu0 0
  %234 = vmatmul.mubr.bf16.gmra.mxu0 %v95
  %v235 = vpop.f32.mrf.mxu0
  %v236 = vadd.f32 %v55, %v235
  %v237 = vpop.f32.mrf.mxu0
  %v238 = vpop.f32.mrf.mxu0
  %v239 = vadd.f32 %v55, %v238
  %v240 = vpop.f32.mrf.mxu0
  %241 = vmatprep.mubr.bf16.mxu0 0
  %242 = vmatmul.mubr.bf16.gmra.mxu0 %v96
  %v243 = vpop.f32.mrf.mxu0
  %v244 = vadd.f32 %v55, %v243
  %v245 = vpop.f32.mrf.mxu0
  %v246 = vpop.f32.mrf.mxu0
  %v247 = vadd.f32 %v55, %v246
  %v248 = vpop.f32.mrf.mxu0
  %249 = vdwg.mxu0
  %v250 = vld [vmem:[%s3] sm:$0xf]
  %v251 = vld [vmem:[%s3 + $0x4] sm:$0xf]
  %v252 = vld [vmem:[%s3 + $0x8] sm:$0xf]
  %v253 = vld [vmem:[%s3 + $0xc] sm:$0xf]
  %v254 = vld [vmem:[%s3 + $0x10] sm:$0xf]
  %v255 = vld [vmem:[%s3 + $0x14] sm:$0xf]
  %v256 = vld [vmem:[%s3 + $0x18] sm:$0xf]
  %v257 = vld [vmem:[%s3 + $0x1c] sm:$0xf]
  %v258 = vld [vmem:[%s3 + $0x20] sm:$0xf]
  %v259 = vld [vmem:[%s3 + $0x24] sm:$0xf]
  %v260 = vld [vmem:[%s3 + $0x28] sm:$0xf]
  %v261 = vld [vmem:[%s3 + $0x2c] sm:$0xf]
  %v262 = vld [vmem:[%s3 + $0x30] sm:$0xf]
  %v263 = vld [vmem:[%s3 + $0x34] sm:$0xf]
  %v264 = vld [vmem:[%s3 + $0x38] sm:$0xf]
  %v265 = vld [vmem:[%s3 + $0x3c] sm:$0xf]
  %v266 = vunpack.c.l.bf16 %v250
  %v267 = vunpack.c.l.bf16 %v251
  %v268 = vunpack.c.l.bf16 %v252
  %v269 = vunpack.c.l.bf16 %v253
  %v270 = vunpack.c.l.bf16 %v254
  %v271 = vunpack.c.l.bf16 %v255
  %v272 = vunpack.c.l.bf16 %v256
  %v273 = vunpack.c.l.bf16 %v257
  %v274 = vunpack.c.l.bf16 %v258
  %v275 = vunpack.c.l.bf16 %v259
  %v276 = vunpack.c.l.bf16 %v260
  %v277 = vunpack.c.l.bf16 %v261
  %v278 = vunpack.c.l.bf16 %v262
  %v279 = vunpack.c.l.bf16 %v263
  %v280 = vunpack.c.l.bf16 %v264
  %v281 = vunpack.c.l.bf16 %v265
  %v282 = vadd.f32 %v188, %v266
  %v283 = vadd.f32 %v191, %v267
  %v284 = vadd.f32 %v196, %v268
  %v285 = vadd.f32 %v199, %v269
  %v286 = vadd.f32 %v204, %v270
  %v287 = vadd.f32 %v207, %v271
  %v288 = vadd.f32 %v212, %v272
  %v289 = vadd.f32 %v215, %v273
  %v290 = vadd.f32 %v220, %v274
  %v291 = vadd.f32 %v223, %v275
  %v292 = vadd.f32 %v228, %v276
  %v293 = vadd.f32 %v231, %v277
  %v294 = vadd.f32 %v236, %v278
  %v295 = vadd.f32 %v239, %v279
  %v296 = vadd.f32 %v244, %v280
  %v297 = vadd.f32 %v247, %v281
  %v298 = vmax.f32 %v282, 0.0
  %v299 = vmax.f32 %v283, 0.0
  %v300 = vmax.f32 %v284, 0.0
  %v301 = vmax.f32 %v285, 0.0
  %v302 = vmax.f32 %v286, 0.0
  %v303 = vmax.f32 %v287, 0.0
  %v304 = vmax.f32 %v288, 0.0
  %v305 = vmax.f32 %v289, 0.0
  %v306 = vmax.f32 %v290, 0.0
  %v307 = vmax.f32 %v291, 0.0
  %v308 = vmax.f32 %v292, 0.0
  %v309 = vmax.f32 %v293, 0.0
  %v310 = vmax.f32 %v294, 0.0
  %v311 = vmax.f32 %v295, 0.0
  %v312 = vmax.f32 %v296, 0.0
  %v313 = vmax.f32 %v297, 0.0
  %314 = vst [vmem:[%s4] sm:$0xff] %v298
  %315 = vst [vmem:[%s4 + $0x8] sm:$0xff] %v299
  %316 = vst [vmem:[%s4 + $0x10] sm:$0xff] %v300
  %317 = vst [vmem:[%s4 + $0x18] sm:$0xff] %v301
  %318 = vst [vmem:[%s4 + $0x20] sm:$0xff] %v302
  %319 = vst [vmem:[%s4 + $0x28] sm:$0xff] %v303
  %320 = vst [vmem:[%s4 + $0x30] sm:$0xff] %v304
  %321 = vst [vmem:[%s4 + $0x38] sm:$0xff] %v305
  %322 = vst [vmem:[%s4 + $0x40] sm:$0xff] %v306
  %323 = vst [vmem:[%s4 + $0x48] sm:$0xff] %v307
  %324 = vst [vmem:[%s4 + $0x50] sm:$0xff] %v308
  %325 = vst [vmem:[%s4 + $0x58] sm:$0xff] %v309
  %326 = vst [vmem:[%s4 + $0x60] sm:$0xff] %v310
  %327 = vst [vmem:[%s4 + $0x68] sm:$0xff] %v311
  %328 = vst [vmem:[%s4 + $0x70] sm:$0xff] %v312
  %329 = vst [vmem:[%s4 + $0x78] sm:$0xff] %v313
  // Predicated region
  $region18: #{bottleneck_forward.7} parent=0 // pred_check
    _
  $region19: #{bottleneck_forward.7} parent=0 // pred_check_branch
    %331 = sbr.rel (0) target = $region21
  $region20: #{bottleneck_forward.7} parent=0 // pred_region
    _
  $region21: #{bottleneck_forward.7} parent=0 // pred_fallthru
    _
  // Predicated region
  $region22: #{bottleneck_forward.7} parent=0 // pred_check
    _
  $region23: #{bottleneck_forward.7} parent=0 // pred_check_branch
    %333 = sbr.rel (0) target = $region25
  $region24: #{bottleneck_forward.7} parent=0 // pred_region
    _
  $region25: #{bottleneck_forward.7} parent=0 // pred_fallthru
    _

</llo_original>
